<compile_context>
chip_gen: v7x
topology: tpu7x:2x2x1
jax: 0.10.0
libtpu: 0.0.40
codegen_flags: <defaults>
</compile_context>

<pallas_src>
import functools

import jax
import jax.numpy as jnp
from jax.experimental import pallas as pl
from jax.experimental.pallas import tpu as pltpu


# ---------------------------------------------------------------------------
# Kernel 1: one GIN layer (all but the last).  grid = (row tiles, k tiles)
#   acc[i] = sum_k (A+I)[i, k] @ x[k]          (f32 accumulator, bf16 operands)
#   at last k: x_new[i] = tanh(MLP(acc[i]))    (packed, zero-padded weights)
# x is VMEM-resident; the k-th row block is sliced in-kernel.
# ---------------------------------------------------------------------------
def gin_layer_kernel(a_ref, x_ref, w_ref, b_ref, o_ref, acc_ref, *, tile):
    k = pl.program_id(1)

    @pl.when(k == 0)
    def _init():
        acc_ref[...] = jnp.zeros_like(acc_ref)

    start = pl.multiple_of(k * tile, tile)
    acc_ref[...] += jnp.dot(a_ref[...], x_ref[pl.ds(start, tile), :],
                            preferred_element_type=jnp.float32)

    @pl.when(k == pl.num_programs(1) - 1)
    def _finish():
        h = acc_ref[...]
        # Inner MLP(D, [2D, 2D, D]); weights zero-padded to [Dh, Dh], Dh = 2D.
        for l in range(3):
            y = jnp.dot(h.astype(jnp.bfloat16), w_ref[l],
                        preferred_element_type=jnp.float32) + b_ref[l]
            h = jnp.tanh(y)
        # Outer GNN activation.
        o_ref[...] = jnp.tanh(h).astype(o_ref.dtype)


def _gin_layer(x_pad, A, wp, bp, *, tile, vmem_limit):
    N_pad, Dh = x_pad.shape
    t = tile
    grid = (N_pad // t, N_pad // t)
    kernel = functools.partial(gin_layer_kernel, tile=t)
    return pl.pallas_call(
        kernel,
        out_shape=jax.ShapeDtypeStruct((N_pad, Dh), jnp.bfloat16),
        grid=grid,
        in_specs=[
            pl.BlockSpec((t, t), lambda i, k: (i, k)),          # (A + I) tile
            pl.BlockSpec((N_pad, Dh), lambda i, k: (0, 0)),     # x (VMEM-resident)
            pl.BlockSpec((3, Dh, Dh), lambda i, k: (0, 0, 0)),  # packed W (resident)
            pl.BlockSpec((3, 1, Dh), lambda i, k: (0, 0, 0)),   # packed b (resident)
        ],
        out_specs=pl.BlockSpec((t, Dh), lambda i, k: (i, 0)),
        scratch_shapes=[pltpu.VMEM((t, Dh), jnp.float32)],
        compiler_params=pltpu.CompilerParams(
            dimension_semantics=("parallel", "arbitrary"),
            vmem_limit_bytes=vmem_limit),
    )(A, x_pad, wp, bp)


# ---------------------------------------------------------------------------
# Kernel 2: last GIN layer with scatter_mean fused into the epilogue.
#   pool[g] += P[g, i-tile] @ x_new[i-tile]    (at last k of every row tile)
#   emb = pool * (1/count)                     (at the final grid step)
# The pooled accumulator is carried across row tiles -> row axis "arbitrary".
# ---------------------------------------------------------------------------
def gin_layer_pool_kernel(a_ref, x_ref, w_ref, b_ref, p_ref, inv_ref,
                          emb_ref, acc_ref, pool_ref, *, tile):
    i = pl.program_id(0)
    k = pl.program_id(1)

    @pl.when(jnp.logical_and(i == 0, k == 0))
    def _init_pool():
        pool_ref[...] = jnp.zeros_like(pool_ref)

    @pl.when(k == 0)
    def _init_acc():
        acc_ref[...] = jnp.zeros_like(acc_ref)

    start = pl.multiple_of(k * tile, tile)
    acc_ref[...] += jnp.dot(a_ref[...], x_ref[pl.ds(start, tile), :],
                            preferred_element_type=jnp.float32)

    @pl.when(k == pl.num_programs(1) - 1)
    def _epilogue():
        h = acc_ref[...]
        for l in range(3):
            y = jnp.dot(h.astype(jnp.bfloat16), w_ref[l],
                        preferred_element_type=jnp.float32) + b_ref[l]
            h = jnp.tanh(y)
        x_new = jnp.tanh(h)                       # f32, this row tile
        pool_ref[...] += jnp.dot(p_ref[...], x_new.astype(jnp.bfloat16),
                                 preferred_element_type=jnp.float32)

    @pl.when(jnp.logical_and(i == pl.num_programs(0) - 1,
                             k == pl.num_programs(1) - 1))
    def _final():
        emb_ref[...] = pool_ref[...] * inv_ref[...]


def _gin_layer_pool(x_pad, A, wp, bp, P, inv_counts, *, tile, vmem_limit):
    N_pad, Dh = x_pad.shape
    G = P.shape[0]
    t = tile
    grid = (N_pad // t, N_pad // t)
    kernel = functools.partial(gin_layer_pool_kernel, tile=t)
    return pl.pallas_call(
        kernel,
        out_shape=jax.ShapeDtypeStruct((G, Dh), jnp.float32),
        grid=grid,
        in_specs=[
            pl.BlockSpec((t, t), lambda i, k: (i, k)),          # (A + I) tile
            pl.BlockSpec((N_pad, Dh), lambda i, k: (0, 0)),     # x (VMEM-resident)
            pl.BlockSpec((3, Dh, Dh), lambda i, k: (0, 0, 0)),  # packed W
            pl.BlockSpec((3, 1, Dh), lambda i, k: (0, 0, 0)),   # packed b
            pl.BlockSpec((G, t), lambda i, k: (0, i)),          # segment one-hot tile
            pl.BlockSpec((G, 1), lambda i, k: (0, 0)),          # exact 1/count
        ],
        out_specs=pl.BlockSpec((G, Dh), lambda i, k: (0, 0)),
        scratch_shapes=[pltpu.VMEM((t, Dh), jnp.float32),
                        pltpu.VMEM((G, Dh), jnp.float32)],
        compiler_params=pltpu.CompilerParams(
            # pool accumulator carried across row tiles -> no "parallel" here.
            dimension_semantics=("arbitrary", "arbitrary"),
            vmem_limit_bytes=vmem_limit),
    )(A, x_pad, wp, bp, P, inv_counts)


# ---------------------------------------------------------------------------
# Tile selection: big tiles amortize the ~0.35 us/grid-step overhead on the
# HBM-bound A stream; multiples of 256 feed the v6e/v7x 256x256 MXU; keep >=2
# row tiles when possible so v7x megacore can shard the parallel axis.
# ---------------------------------------------------------------------------
def _pick_tile(N, tile_nodes):
    req = max(256, (int(tile_nodes) // 256) * 256)
    n_min = int(pl.cdiv(N, 256)) * 256
    t = min(req, n_min)
    while t > 256 and (int(pl.cdiv(N, t)) * t) // t < 2:
        t //= 2
    return t


# ---------------------------------------------------------------------------
# Wrapper: pads nodes, builds bf16 (A + I) / segment matrix, runs the layers.
# ---------------------------------------------------------------------------
def gnn_forward(attrs, edge_index, batch, packed_params, num_graphs, *,
                tile_nodes=1024):
    N, D = attrs.shape
    Dh = 2 * D
    G = num_graphs
    t = _pick_tile(N, tile_nodes)
    N_pad = int(pl.cdiv(N, t)) * t

    # VMEM budget estimate (double-buffered A tile dominates); cap at 48 MiB to
    # keep headroom on v7x's 64 MiB.  v5e/v6e (128 MiB) could go higher.
    est = (2 * t * t * 2                       # A tile, double-buffered, bf16
           + 2 * N_pad * Dh * 2                # resident x (conservative x2)
           + 2 * (3 * Dh * Dh * 2 + 3 * Dh * 4)
           + t * Dh * 4 + G * Dh * 4           # f32 accumulators
           + 2 * t * Dh * 2 + 2 * G * t * 2 + 2 * G * Dh * 4)
    vmem_limit = int(min(48 * 1024 * 1024, max(32 * 1024 * 1024, 2 * est)))

    # Node features padded to [N_pad, Dh] (zero pad columns/rows), bf16 operands.
    x = jnp.zeros((N_pad, Dh), jnp.float32).at[:N, :D].set(
        attrs.astype(jnp.float32)).astype(jnp.bfloat16)

    # Dense adjacency with the GIN self term folded in (eps = 0):
    #   (A + I)[i, j] = [i == j] + #edges j -> i   (PyG source_to_target).
    # Built in f32 (exact multiplicities), cast to bf16 for the MXU.
    src, dst = edge_index[0], edge_index[1]
    A = jnp.zeros((N_pad, N_pad), jnp.float32).at[dst, src].add(1.0)
    A = (A + jnp.eye(N_pad, dtype=jnp.float32)).astype(jnp.bfloat16)
    # TODO(synk): CSR / edge-gather path (PrefetchScalarGridSpec) for large
    # sparse graphs so traffic is O(E*D) instead of O(N^2).

    # scatter_mean operands: unnormalized one-hot segment matrix (padded nodes
    # map to graph id G -> never contribute) and exact 1/count in f32.
    batch_pad = jnp.full((N_pad,), G, jnp.int32).at[:N].set(
        batch.astype(jnp.int32))
    P_bool = (batch_pad[None, :] ==
              jnp.arange(G, dtype=jnp.int32)[:, None])
    counts = jnp.maximum(
        jnp.sum(P_bool.astype(jnp.float32), axis=1, keepdims=True), 1.0)
    inv_counts = (1.0 / counts).astype(jnp.float32)
    P = P_bool.astype(jnp.bfloat16)

    # All but the last GIN layer.
    for wp, bp in packed_params[:-1]:
        x = _gin_layer(x, A, wp, bp, tile=t, vmem_limit=vmem_limit)

    # Last GIN layer fused with scatter_mean.
    wp, bp = packed_params[-1]
    emb = _gin_layer_pool(x, A, wp, bp, P, inv_counts, tile=t,
                          vmem_limit=vmem_limit)
    return emb[:, :D]


# ---------------------------------------------------------------------------
# Parameter init (PyTorch nn.Linear-style uniform) and packing.
# ---------------------------------------------------------------------------
def init_raw_params(key, D, num_layers=2):
    """Raw per-linear (W[in,out], b[out]) for each GIN layer's MLP(D,[2D,2D,D])."""
    layers = []
    for _ in range(num_layers):
        layer = []
        for fi, fo in [(D, 2 * D), (2 * D, 2 * D), (2 * D, D)]:
            key, kw, kb = jax.random.split(key, 3)
            bound = 1.0 / (fi ** 0.5)
            w = jax.random.uniform(kw, (fi, fo), jnp.float32, -bound, bound)
            b = jax.random.uniform(kb, (fo,), jnp.float32, -bound, bound)
            layer.append((w, b))
        layers.append(layer)
    return layers


def pack_params(raw_layers, D):
    """Pack each layer's 3 linears into one [3, Dh, Dh] bf16 weight slab and one
    [3, 1, Dh] f32 bias slab (zero-padded).  Zero padding is exact through the
    pipeline: padded lanes stay 0 after every bias-add/tanh."""
    Dh = 2 * D
    packed = []
    for layer in raw_layers:
        wp = jnp.zeros((3, Dh, Dh), jnp.float32)
        bp = jnp.zeros((3, 1, Dh), jnp.float32)
        for l, (w, b) in enumerate(layer):
            fi, fo = w.shape
            wp = wp.at[l, :fi, :fo].set(w)
            bp = bp.at[l, 0, :fo].set(b)
        packed.append((wp.astype(jnp.bfloat16), bp))
    return packed


# ---------------------------------------------------------------------------
# Pure-JAX f32 reference (matches the PyTorch module semantics).
# ---------------------------------------------------------------------------
def gnn_reference(attrs, edge_index, batch, raw_layers, num_graphs):
    x = attrs.astype(jnp.float32)
    src, dst = edge_index[0], edge_index[1]
    for layer in raw_layers:
        agg = jnp.zeros_like(x).at[dst].add(x[src])
        h = x + agg
        for w, b in layer:
            h = jnp.tanh(h @ w + b)
        x = jnp.tanh(h)
    G = num_graphs
    sums = jnp.zeros((G, x.shape[1]), jnp.float32).at[batch].add(x)
    cnt = jnp.zeros((G,), jnp.float32).at[batch].add(1.0)
    return sums / jnp.maximum(cnt, 1.0)[:, None]


if __name__ == "__main__":
    key = jax.random.PRNGKey(0)

    attrs_dim = 8          # node attribute dim D
    num_graphs = 8         # graphs in the batch
    nodes_per_graph = 32
    num_nodes = num_graphs * nodes_per_graph   # 256 -> single 256-wide tile

    k_attr, k_param = jax.random.split(key)
    attrs = jax.random.normal(k_attr, (num_nodes, attrs_dim), jnp.float32)

    # Deterministic bidirectional ring graphs (PyG layout [2, E]).
    srcs, dsts = [], []
    for g in range(num_graphs):
        base = g * nodes_per_graph
        for i in range(nodes_per_graph):
            a, b = base + i, base + (i + 1) % nodes_per_graph
            srcs += [a, b]
            dsts += [b, a]
    edge_index = jnp.array([srcs, dsts], dtype=jnp.int32)
    batch = jnp.repeat(jnp.arange(num_graphs, dtype=jnp.int32), nodes_per_graph)

    raw_params = init_raw_params(k_param, attrs_dim, num_layers=2)
    packed_params = pack_params(raw_params, attrs_dim)

    emb = gnn_forward(attrs, edge_index, batch, packed_params, num_graphs,
                      tile_nodes=1024)
    emb = jax.block_until_ready(emb)

    assert emb.shape == (num_graphs, attrs_dim)
    assert bool(jnp.all(jnp.isfinite(emb)))

    # Correctness vs. f32 reference (kernel runs bf16 operands / f32 accumulate).
    ref = gnn_reference(attrs, edge_index, batch, raw_params, num_graphs)
    max_err = float(jnp.max(jnp.abs(emb - ref)))
    assert max_err < 0.1, f"max abs error too large: {max_err}"

    print("KERNEL_OK")
</pallas_src>

<mosaic_0001>
module attributes {stable_mosaic.version = 11 : i64} {
  func.func @gin_layer_kernel(%arg0: i32, %arg1: i32, %arg2: memref<256x256xbf16, #tpu.memory_space<vmem>>, %arg3: memref<256x16xbf16, #tpu.memory_space<vmem>>, %arg4: memref<3x16x16xbf16, #tpu.memory_space<vmem>>, %arg5: memref<3x1x16xf32, #tpu.memory_space<vmem>>, %arg6: memref<256x16xbf16, #tpu.memory_space<vmem>>, %arg7: memref<256x16xf32, #tpu.memory_space<vmem>>) attributes {dimension_semantics = [#tpu.dimension_semantics<parallel>, #tpu.dimension_semantics<arbitrary>], iteration_bounds = array<i64: 1, 1>, scalar_prefetch = 0 : i64, scratch_operands = 1 : i64, tpu.core_type = #tpu.core_type<tc>, window_params = [{transform_indices = @transform_0, window_bounds = array<i64: 256, 256>}, {pipeline_mode = #tpu.pipeline_mode<synchronous>, transform_indices = @transform_1, window_bounds = array<i64: 256, 16>}, {pipeline_mode = #tpu.pipeline_mode<synchronous>, transform_indices = @transform_2, window_bounds = array<i64: 3, 16, 16>}, {pipeline_mode = #tpu.pipeline_mode<synchronous>, transform_indices = @transform_3, window_bounds = array<i64: 3, 1, 16>}, {transform_indices = @transform_4, window_bounds = array<i64: 256, 16>}]} {
    %c0_i32 = arith.constant 0 : i32
    %0 = arith.cmpi eq, %arg1, %c0_i32 : i32
    %1 = arith.extui %0 : i1 to i32
    %c0_i32_0 = arith.constant 0 : i32
    %2 = arith.cmpi ne, %1, %c0_i32_0 : i32
    scf.if %2 {
      %cst_9 = arith.constant 0.000000e+00 : f32
      %15 = vector.broadcast %cst_9 : f32 to vector<256x16xf32>
      %c0_10 = arith.constant 0 : index
      %c0_11 = arith.constant 0 : index
      %16 = vector.load %arg7[%c0_10, %c0_11] : memref<256x16xf32, #tpu.memory_space<vmem>>, vector<256x16xf32>
      tpu.vector_store %arg7[%c0_10, %c0_11], %15 {strides = array<i32>} : memref<256x16xf32, #tpu.memory_space<vmem>>, vector<256x16xf32>,
    } else {
    }
    %c256_i32 = arith.constant 256 : i32
    %3 = arith.muli %arg1, %c256_i32 : i32
    %4 = tpu.assume_multiple %3, 256 : i32
    %c0 = arith.constant 0 : index
    %c0_1 = arith.constant 0 : index
    %5 = vector.load %arg7[%c0, %c0_1] : memref<256x16xf32, #tpu.memory_space<vmem>>, vector<256x16xf32>
    %c0_2 = arith.constant 0 : index
    %c0_3 = arith.constant 0 : index
    %6 = vector.load %arg2[%c0_2, %c0_3] : memref<256x256xbf16, #tpu.memory_space<vmem>>, vector<256x256xbf16>
    %7 = arith.index_cast %4 : i32 to index
    %c0_4 = arith.constant 0 : index
    %8 = vector.load %arg3[%7, %c0_4] : memref<256x16xbf16, #tpu.memory_space<vmem>>, vector<256x16xbf16>
    %cst = arith.constant dense<0.000000e+00> : vector<256x16xf32>
    %9 = tpu.matmul %6, %8, %cst {dimension_numbers = #tpu.dot_dimension_numbers<[1], [0], [0], [1], [0, 0, 1, 1], [], []>} : vector<256x256xbf16>, vector<256x16xbf16>, vector<256x16xf32> -> vector<256x16xf32>
    %10 = arith.addf %5, %9 : vector<256x16xf32>
    %c0_5 = arith.constant 0 : index
    %c0_6 = arith.constant 0 : index
    %11 = vector.load %arg7[%c0_5, %c0_6] : memref<256x16xf32, #tpu.memory_space<vmem>>, vector<256x16xf32>
    tpu.vector_store %arg7[%c0_5, %c0_6], %10 {strides = array<i32>} : memref<256x16xf32, #tpu.memory_space<vmem>>, vector<256x16xf32>,
    %c0_i32_7 = arith.constant 0 : i32
    %12 = arith.cmpi eq, %arg1, %c0_i32_7 : i32
    %13 = arith.extui %12 : i1 to i32
    %c0_i32_8 = arith.constant 0 : i32
    %14 = arith.cmpi ne, %13, %c0_i32_8 : i32
    scf.if %14 {
      %c0_9 = arith.constant 0 : index
      %c0_10 = arith.constant 0 : index
      %15 = vector.load %arg7[%c0_9, %c0_10] : memref<256x16xf32, #tpu.memory_space<vmem>>, vector<256x16xf32>
      %16 = arith.truncf %15 : vector<256x16xf32> to vector<256x16xbf16>
      %c0_11 = arith.constant 0 : index
      %c0_12 = arith.constant 0 : index
      %c0_13 = arith.constant 0 : index
      %17 = vector.load %arg4[%c0_11, %c0_12, %c0_13] : memref<3x16x16xbf16, #tpu.memory_space<vmem>>, vector<1x16x16xbf16>
      %18 = vector.shape_cast %17 : vector<1x16x16xbf16> to vector<16x16xbf16>
      %cst_14 = arith.constant dense<0.000000e+00> : vector<256x16xf32>
      %19 = tpu.matmul %16, %18, %cst_14 {dimension_numbers = #tpu.dot_dimension_numbers<[1], [0], [0], [1], [0, 0, 1, 1], [], []>} : vector<256x16xbf16>, vector<16x16xbf16>, vector<256x16xf32> -> vector<256x16xf32>
      %c0_15 = arith.constant 0 : index
      %c0_16 = arith.constant 0 : index
      %c0_17 = arith.constant 0 : index
      %20 = vector.load %arg5[%c0_15, %c0_16, %c0_17] : memref<3x1x16xf32, #tpu.memory_space<vmem>>, vector<1x1x16xf32>
      %21 = vector.shape_cast %20 : vector<1x1x16xf32> to vector<1x16xf32>
      %22 = vector.broadcast %21 : vector<1x16xf32> to vector<256x16xf32>
      %23 = arith.addf %19, %22 : vector<256x16xf32>
      %24 = math.tanh %23 : vector<256x16xf32>
      %25 = arith.truncf %24 : vector<256x16xf32> to vector<256x16xbf16>
      %c1 = arith.constant 1 : index
      %c0_18 = arith.constant 0 : index
      %c0_19 = arith.constant 0 : index
      %26 = vector.load %arg4[%c1, %c0_18, %c0_19] : memref<3x16x16xbf16, #tpu.memory_space<vmem>>, vector<1x16x16xbf16>
      %27 = vector.shape_cast %26 : vector<1x16x16xbf16> to vector<16x16xbf16>
      %cst_20 = arith.constant dense<0.000000e+00> : vector<256x16xf32>
      %28 = tpu.matmul %25, %27, %cst_20 {dimension_numbers = #tpu.dot_dimension_numbers<[1], [0], [0], [1], [0, 0, 1, 1], [], []>} : vector<256x16xbf16>, vector<16x16xbf16>, vector<256x16xf32> -> vector<256x16xf32>
      %c1_21 = arith.constant 1 : index
      %c0_22 = arith.constant 0 : index
      %c0_23 = arith.constant 0 : index
      %29 = vector.load %arg5[%c1_21, %c0_22, %c0_23] : memref<3x1x16xf32, #tpu.memory_space<vmem>>, vector<1x1x16xf32>
      %30 = vector.shape_cast %29 : vector<1x1x16xf32> to vector<1x16xf32>
      %31 = vector.broadcast %30 : vector<1x16xf32> to vector<256x16xf32>
      %32 = arith.addf %28, %31 : vector<256x16xf32>
      %33 = math.tanh %32 : vector<256x16xf32>
      %34 = arith.truncf %33 : vector<256x16xf32> to vector<256x16xbf16>
      %c2 = arith.constant 2 : index
      %c0_24 = arith.constant 0 : index
      %c0_25 = arith.constant 0 : index
      %35 = vector.load %arg4[%c2, %c0_24, %c0_25] : memref<3x16x16xbf16, #tpu.memory_space<vmem>>, vector<1x16x16xbf16>
      %36 = vector.shape_cast %35 : vector<1x16x16xbf16> to vector<16x16xbf16>
      %cst_26 = arith.constant dense<0.000000e+00> : vector<256x16xf32>
      %37 = tpu.matmul %34, %36, %cst_26 {dimension_numbers = #tpu.dot_dimension_numbers<[1], [0], [0], [1], [0, 0, 1, 1], [], []>} : vector<256x16xbf16>, vector<16x16xbf16>, vector<256x16xf32> -> vector<256x16xf32>
      %c2_27 = arith.constant 2 : index
      %c0_28 = arith.constant 0 : index
      %c0_29 = arith.constant 0 : index
      %38 = vector.load %arg5[%c2_27, %c0_28, %c0_29] : memref<3x1x16xf32, #tpu.memory_space<vmem>>, vector<1x1x16xf32>
      %39 = vector.shape_cast %38 : vector<1x1x16xf32> to vector<1x16xf32>
      %40 = vector.broadcast %39 : vector<1x16xf32> to vector<256x16xf32>
      %41 = arith.addf %37, %40 : vector<256x16xf32>
      %42 = math.tanh %41 : vector<256x16xf32>
      %43 = math.tanh %42 : vector<256x16xf32>
      %44 = arith.truncf %43 : vector<256x16xf32> to vector<256x16xbf16>
      %c0_30 = arith.constant 0 : index
      %c0_31 = arith.constant 0 : index
      %45 = vector.load %arg6[%c0_30, %c0_31] : memref<256x16xbf16, #tpu.memory_space<vmem>>, vector<256x16xbf16>
      tpu.vector_store %arg6[%c0_30, %c0_31], %44 {strides = array<i32>} : memref<256x16xbf16, #tpu.memory_space<vmem>>, vector<256x16xbf16>,
    } else {
    }
    return
  }
  func.func @transform_0(%arg0: i32, %arg1: i32) -> (i32, i32) {
    %c0_i32 = arith.constant 0 : i32
    return %arg0, %arg1 : i32, i32
  }
  func.func @transform_1(%arg0: i32, %arg1: i32) -> (i32, i32) {
    %c0_i32 = arith.constant 0 : i32
    %c0_i32_0 = arith.constant 0 : i32
    %c0_i32_1 = arith.constant 0 : i32
    return %c0_i32, %c0_i32_0 : i32, i32
  }
  func.func @transform_2(%arg0: i32, %arg1: i32) -> (i32, i32, i32) {
    %c0_i32 = arith.constant 0 : i32
    %c0_i32_0 = arith.constant 0 : i32
    %c0_i32_1 = arith.constant 0 : i32
    %c0_i32_2 = arith.constant 0 : i32
    return %c0_i32, %c0_i32_0, %c0_i32_1 : i32, i32, i32
  }
  func.func @transform_3(%arg0: i32, %arg1: i32) -> (i32, i32, i32) {
    %c0_i32 = arith.constant 0 : i32
    %c0_i32_0 = arith.constant 0 : i32
    %c0_i32_1 = arith.constant 0 : i32
    %c0_i32_2 = arith.constant 0 : i32
    return %c0_i32, %c0_i32_0, %c0_i32_1 : i32, i32, i32
  }
  func.func @transform_4(%arg0: i32, %arg1: i32) -> (i32, i32) {
    %c0_i32 = arith.constant 0 : i32
    %c0_i32_0 = arith.constant 0 : i32
    return %arg0, %c0_i32 : i32, i32
  }
}

</mosaic_0001>

<llo_original>
// kernel: tpu_custom_call.1
$region0: #{tpu_custom_call.1}
  #allocation0 [shape = 'u32[]', space=smem, size = 0x4, offset = 0x4, fixed_abs, tag = 'smem constant byte address 0x4 - core index']
  #allocation1 [shape = 'u32[144,128]{1,0:T(1,128)}', space=vmem, size = 0x12000, scoped, tag = 'internal scratch']
  #allocation2 [shape = 'f32[256,16]{1,0:T(8,128)}', space=vmem, size = 0x20000, scoped, tag = 'scratch operand']
  %s0 = inlined_call_operand.hbm [shape: bf16[256,256], index: 0, kind: input, shape index: {}]
  %s1 = inlined_call_operand.vmem [shape: bf16[256,16], index: 1, kind: input, shape index: {}]
  %s2 = inlined_call_operand.vmem [shape: bf16[3,16,16], index: 2, kind: input, shape index: {}]
  %s3 = inlined_call_operand.vmem [shape: f32[3,1,16], index: 3, kind: input, shape index: {}]
  %s4 = inlined_call_operand.vmem [shape: bf16[256,16], index: 4, kind: output, shape index: {}]
  %s5 = sld [smem:[#allocation0]]
  $region38: #{tpu_custom_call.1} parent=0
    _
  %s7 = ssub.s32 1, %s5
  %s8 = scalar_select 0, %s7, %s5
  $region1: #{tpu_custom_call.1} parent=0
    #allocation3 [shape = 'u8[131072]{0}', space=vmem, size = 0x20000, scoped, tag = 'input window, operand 0, single buffered']
    #allocation4 [shape = 's32[1]{0}', space=sflag, size = 0x4, scoped, tag = 'scoped memory for tpu_custom_call.1']
    %9 = vsyncpa [#allocation4], 0
    // Predicated region
    $region2: #{tpu_custom_call.1} parent=1 // pred_check
      _
    $region3: #{tpu_custom_call.1} parent=1 // pred_check_branch
      %11 = sbr.rel (0) target = $region5
    $region4: #{tpu_custom_call.1} parent=1 // pred_region
      %s13 = ssub.s32 4096, 4096
      %14 = vsyncadd [#allocation4], %s13
      %s15 = sshll.u32 [#allocation3], 4
      %s16 = int_to_ptr.vmem [resolvable:$true] %s15
      %21 = dma.hbm_to_vmem [thread:$0]  %s0, 4096, %s16, [#allocation4], 128, 128, 8
    $region5: #{tpu_custom_call.1} parent=1 // pred_fallthru
      _
    // Predicated region
    $region6: #{tpu_custom_call.1} parent=1 // pred_check
      _
    $region7: #{tpu_custom_call.1} parent=1 // pred_check_branch
      %23 = sbr.rel (0) target = $region9
    $region8: #{tpu_custom_call.1} parent=1 // pred_region
      _
    $region9: #{tpu_custom_call.1} parent=1 // pred_fallthru
      _
    // Predicated region
    $region10: #{tpu_custom_call.1} parent=1 // pred_check
      _
    $region11: #{tpu_custom_call.1} parent=1 // pred_check_branch
      %25 = sbr.rel (0) target = $region13
    $region12: #{tpu_custom_call.1} parent=1 // pred_region
      _
    $region13: #{tpu_custom_call.1} parent=1 // pred_fallthru
      _
    // Predicated region
    $region14: #{tpu_custom_call.1} parent=1 // pred_check
      _
    $region15: #{tpu_custom_call.1} parent=1 // pred_check_branch
      %27 = sbr.rel (0) target = $region17
    $region16: #{tpu_custom_call.1} parent=1 // pred_region
      _
    $region17: #{tpu_custom_call.1} parent=1 // pred_fallthru
      _
    // Predicated region
    $region18: #{tpu_custom_call.1} parent=1 // pred_check
      _
    $region19: #{tpu_custom_call.1} parent=1 // pred_check_branch
      %29 = sbr.rel (0) target = $region21
    $region20: #{tpu_custom_call.1} parent=1 // pred_region
      %30 = dma.done [#allocation4], 4096
    $region21: #{tpu_custom_call.1} parent=1 // pred_fallthru
      _
    %p32 = scmp.eq.s32.totalorder 0, 0
    // Predicated region
    $region22: #{tpu_custom_call.1} parent=1 // pred_check
      %p33 = pneg %p32
    $region23: #{tpu_custom_call.1} parent=1 // pred_check_branch
      %35 = sbr.rel (%p33) target = $region25
    $region24: #{tpu_custom_call.1} parent=1 // pred_region
      %vm36 = vcmask 130048
      %37 = vst.msk [vmem:[#allocation2] sm:$0xff] %vm36, 0.0
      %38 = vst.msk [vmem:[#allocation2 + $0x8] sm:$0xff] %vm36, 0.0
      %39 = vst.msk [vmem:[#allocation2 + $0x10] sm:$0xff] %vm36, 0.0
      %40 = vst.msk [vmem:[#allocation2 + $0x18] sm:$0xff] %vm36, 0.0
      %41 = vst.msk [vmem:[#allocation2 + $0x20] sm:$0xff] %vm36, 0.0
      %42 = vst.msk [vmem:[#allocation2 + $0x28] sm:$0xff] %vm36, 0.0
      %43 = vst.msk [vmem:[#allocation2 + $0x30] sm:$0xff] %vm36, 0.0
      %44 = vst.msk [vmem:[#allocation2 + $0x38] sm:$0xff] %vm36, 0.0
      %45 = vst.msk [vmem:[#allocation2 + $0x40] sm:$0xff] %vm36, 0.0
      %46 = vst.msk [vmem:[#allocation2 + $0x48] sm:$0xff] %vm36, 0.0
      %47 = vst.msk [vmem:[#allocation2 + $0x50] sm:$0xff] %vm36, 0.0
      %48 = vst.msk [vmem:[#allocation2 + $0x58] sm:$0xff] %vm36, 0.0
      %49 = vst.msk [vmem:[#allocation2 + $0x60] sm:$0xff] %vm36, 0.0
      %50 = vst.msk [vmem:[#allocation2 + $0x68] sm:$0xff] %vm36, 0.0
      %51 = vst.msk [vmem:[#allocation2 + $0x70] sm:$0xff] %vm36, 0.0
      %52 = vst.msk [vmem:[#allocation2 + $0x78] sm:$0xff] %vm36, 0.0
      %53 = vst.msk [vmem:[#allocation2 + $0x80] sm:$0xff] %vm36, 0.0
      %54 = vst.msk [vmem:[#allocation2 + $0x88] sm:$0xff] %vm36, 0.0
      %55 = vst.msk [vmem:[#allocation2 + $0x90] sm:$0xff] %vm36, 0.0
      %56 = vst.msk [vmem:[#allocation2 + $0x98] sm:$0xff] %vm36, 0.0
      %57 = vst.msk [vmem:[#allocation2 + $0xa0] sm:$0xff] %vm36, 0.0
      %58 = vst.msk [vmem:[#allocation2 + $0xa8] sm:$0xff] %vm36, 0.0
      %59 = vst.msk [vmem:[#allocation2 + $0xb0] sm:$0xff] %vm36, 0.0
      %60 = vst.msk [vmem:[#allocation2 + $0xb8] sm:$0xff] %vm36, 0.0
      %61 = vst.msk [vmem:[#allocation2 + $0xc0] sm:$0xff] %vm36, 0.0
      %62 = vst.msk [vmem:[#allocation2 + $0xc8] sm:$0xff] %vm36, 0.0
      %63 = vst.msk [vmem:[#allocation2 + $0xd0] sm:$0xff] %vm36, 0.0
      %64 = vst.msk [vmem:[#allocation2 + $0xd8] sm:$0xff] %vm36, 0.0
      %65 = vst.msk [vmem:[#allocation2 + $0xe0] sm:$0xff] %vm36, 0.0
      %66 = vst.msk [vmem:[#allocation2 + $0xe8] sm:$0xff] %vm36, 0.0
      %67 = vst.msk [vmem:[#allocation2 + $0xf0] sm:$0xff] %vm36, 0.0
      %68 = vst.msk [vmem:[#allocation2 + $0xf8] sm:$0xff] %vm36, 0.0
    $region25: #{tpu_custom_call.1} parent=1 // pred_fallthru
      _
    %s69 = smul.u32 0, 256
    %v70 = vld [vmem:[#allocation2] sm:$0xff]
    %v71 = vld [vmem:[#allocation2 + $0x8] sm:$0xff]
    %v72 = vld [vmem:[#allocation2 + $0x10] sm:$0xff]
    %v73 = vld [vmem:[#allocation2 + $0x18] sm:$0xff]
    %v74 = vld [vmem:[#allocation2 + $0x20] sm:$0xff]
    %v75 = vld [vmem:[#allocation2 + $0x28] sm:$0xff]
    %v76 = vld [vmem:[#allocation2 + $0x30] sm:$0xff]
    %v77 = vld [vmem:[#allocation2 + $0x38] sm:$0xff]
    %v78 = vld [vmem:[#allocation2 + $0x40] sm:$0xff]
    %v79 = vld [vmem:[#allocation2 + $0x48] sm:$0xff]
    %v80 = vld [vmem:[#allocation2 + $0x50] sm:$0xff]
    %v81 = vld [vmem:[#allocation2 + $0x58] sm:$0xff]
    %v82 = vld [vmem:[#allocation2 + $0x60] sm:$0xff]
    %v83 = vld [vmem:[#allocation2 + $0x68] sm:$0xff]
    %v84 = vld [vmem:[#allocation2 + $0x70] sm:$0xff]
    %v85 = vld [vmem:[#allocation2 + $0x78] sm:$0xff]
    %v86 = vld [vmem:[#allocation2 + $0x80] sm:$0xff]
    %v87 = vld [vmem:[#allocation2 + $0x88] sm:$0xff]
    %v88 = vld [vmem:[#allocation2 + $0x90] sm:$0xff]
    %v89 = vld [vmem:[#allocation2 + $0x98] sm:$0xff]
    %v90 = vld [vmem:[#allocation2 + $0xa0] sm:$0xff]
    %v91 = vld [vmem:[#allocation2 + $0xa8] sm:$0xff]
    %v92 = vld [vmem:[#allocation2 + $0xb0] sm:$0xff]
    %v93 = vld [vmem:[#allocation2 + $0xb8] sm:$0xff]
    %v94 = vld [vmem:[#allocation2 + $0xc0] sm:$0xff]
    %v95 = vld [vmem:[#allocation2 + $0xc8] sm:$0xff]
    %v96 = vld [vmem:[#allocation2 + $0xd0] sm:$0xff]
    %v97 = vld [vmem:[#allocation2 + $0xd8] sm:$0xff]
    %v98 = vld [vmem:[#allocation2 + $0xe0] sm:$0xff]
    %v99 = vld [vmem:[#allocation2 + $0xe8] sm:$0xff]
    %v100 = vld [vmem:[#allocation2 + $0xf0] sm:$0xff]
    %v101 = vld [vmem:[#allocation2 + $0xf8] sm:$0xff]
    %v102 = vld [vmem:[#allocation3] sm:$0xff]
    %v103 = vld [vmem:[#allocation3 + $0x8] sm:$0xff]
    %v104 = vld [vmem:[#allocation3 + $0x10] sm:$0xff]
    %v105 = vld [vmem:[#allocation3 + $0x18] sm:$0xff]
    %v106 = vld [vmem:[#allocation3 + $0x20] sm:$0xff]
    %v107 = vld [vmem:[#allocation3 + $0x28] sm:$0xff]
    %v108 = vld [vmem:[#allocation3 + $0x30] sm:$0xff]
    %v109 = vld [vmem:[#allocation3 + $0x38] sm:$0xff]
    %v110 = vld [vmem:[#allocation3 + $0x40] sm:$0xff]
    %v111 = vld [vmem:[#allocation3 + $0x48] sm:$0xff]
    %v112 = vld [vmem:[#allocation3 + $0x50] sm:$0xff]
    %v113 = vld [vmem:[#allocation3 + $0x58] sm:$0xff]
    %v114 = vld [vmem:[#allocation3 + $0x60] sm:$0xff]
    %v115 = vld [vmem:[#allocation3 + $0x68] sm:$0xff]
    %v116 = vld [vmem:[#allocation3 + $0x70] sm:$0xff]
    %v117 = vld [vmem:[#allocation3 + $0x78] sm:$0xff]
    %v118 = vld [vmem:[#allocation3 + $0x80] sm:$0xff]
    %v119 = vld [vmem:[#allocation3 + $0x88] sm:$0xff]
    %v120 = vld [vmem:[#allocation3 + $0x90] sm:$0xff]
    %v121 = vld [vmem:[#allocation3 + $0x98] sm:$0xff]
    %v122 = vld [vmem:[#allocation3 + $0xa0] sm:$0xff]
    %v123 = vld [vmem:[#allocation3 + $0xa8] sm:$0xff]
    %v124 = vld [vmem:[#allocation3 + $0xb0] sm:$0xff]
    %v125 = vld [vmem:[#allocation3 + $0xb8] sm:$0xff]
    %v126 = vld [vmem:[#allocation3 + $0xc0] sm:$0xff]
    %v127 = vld [vmem:[#allocation3 + $0xc8] sm:$0xff]
    %v128 = vld [vmem:[#allocation3 + $0xd0] sm:$0xff]
    %v129 = vld [vmem:[#allocation3 + $0xd8] sm:$0xff]
    %v130 = vld [vmem:[#allocation3 + $0xe0] sm:$0xff]
    %v131 = vld [vmem:[#allocation3 + $0xe8] sm:$0xff]
    %v132 = vld [vmem:[#allocation3 + $0xf0] sm:$0xff]
    %v133 = vld [vmem:[#allocation3 + $0xf8] sm:$0xff]
    %s134 = sshra.s32 %s69, 3
    %s135 = sand.u32 %s69, 7
    %s136 = smul.addr %s134, 4
    %s137 = scalar_lea.vmem %s1, %s136
    %v138 = vld [vmem:[%s137] sm:$0xf]
    %v139 = vld [vmem:[%s137 + $0x4] sm:$0xf]
    %v140 = vld [vmem:[%s137 + $0x8] sm:$0xf]
    %v141 = vld [vmem:[%s137 + $0xc] sm:$0xf]
    %v142 = vld [vmem:[%s137 + $0x10] sm:$0xf]
    %v143 = vld [vmem:[%s137 + $0x14] sm:$0xf]
    %v144 = vld [vmem:[%s137 + $0x18] sm:$0xf]
    %v145 = vld [vmem:[%s137 + $0x1c] sm:$0xf]
    %v146 = vld [vmem:[%s137 + $0x20] sm:$0xf]
    %v147 = vld [vmem:[%s137 + $0x24] sm:$0xf]
    %v148 = vld [vmem:[%s137 + $0x28] sm:$0xf]
    %v149 = vld [vmem:[%s137 + $0x2c] sm:$0xf]
    %v150 = vld [vmem:[%s137 + $0x30] sm:$0xf]
    %v151 = vld [vmem:[%s137 + $0x34] sm:$0xf]
    %v152 = vld [vmem:[%s137 + $0x38] sm:$0xf]
    %v153 = vld [vmem:[%s137 + $0x3c] sm:$0xf]
    %v154 = vld [vmem:[%s137 + $0x40] sm:$0xf]
    %v155 = vld [vmem:[%s137 + $0x44] sm:$0xf]
    %v156 = vld [vmem:[%s137 + $0x48] sm:$0xf]
    %v157 = vld [vmem:[%s137 + $0x4c] sm:$0xf]
    %v158 = vld [vmem:[%s137 + $0x50] sm:$0xf]
    %v159 = vld [vmem:[%s137 + $0x54] sm:$0xf]
    %v160 = vld [vmem:[%s137 + $0x58] sm:$0xf]
    %v161 = vld [vmem:[%s137 + $0x5c] sm:$0xf]
    %v162 = vld [vmem:[%s137 + $0x60] sm:$0xf]
    %v163 = vld [vmem:[%s137 + $0x64] sm:$0xf]
    %v164 = vld [vmem:[%s137 + $0x68] sm:$0xf]
    %v165 = vld [vmem:[%s137 + $0x6c] sm:$0xf]
    %v166 = vld [vmem:[%s137 + $0x70] sm:$0xf]
    %v167 = vld [vmem:[%s137 + $0x74] sm:$0xf]
    %v168 = vld [vmem:[%s137 + $0x78] sm:$0xf]
    %v169 = vld [vmem:[%s137 + $0x7c] sm:$0xf]
    %v202 = vunpack.c.l.b16 %v102
    %v203 = vunpack.c.h.b16 %v102
    %v204 = vunpack.c.l.b16 %v103
    %v205 = vunpack.c.h.b16 %v103
    %v206 = vunpack.c.l.b16 %v104
    %v207 = vunpack.c.h.b16 %v104
    %v208 = vunpack.c.l.b16 %v105
    %v209 = vunpack.c.h.b16 %v105
    %v210 = vunpack.c.l.b16 %v106
    %v211 = vunpack.c.h.b16 %v106
    %v212 = vunpack.c.l.b16 %v107
    %v213 = vunpack.c.h.b16 %v107
    %v214 = vunpack.c.l.b16 %v108
    %v215 = vunpack.c.h.b16 %v108
    %v216 = vunpack.c.l.b16 %v109
    %v217 = vunpack.c.h.b16 %v109
    %v218 = vunpack.c.l.b16 %v110
    %v219 = vunpack.c.h.b16 %v110
    %v220 = vunpack.c.l.b16 %v111
    %v221 = vunpack.c.h.b16 %v111
    %v222 = vunpack.c.l.b16 %v112
    %v223 = vunpack.c.h.b16 %v112
    %v224 = vunpack.c.l.b16 %v113
    %v225 = vunpack.c.h.b16 %v113
    %v226 = vunpack.c.l.b16 %v114
    %v227 = vunpack.c.h.b16 %v114
    %v228 = vunpack.c.l.b16 %v115
    %v229 = vunpack.c.h.b16 %v115
    %v230 = vunpack.c.l.b16 %v116
    %v231 = vunpack.c.h.b16 %v116
    %v232 = vunpack.c.l.b16 %v117
    %v233 = vunpack.c.h.b16 %v117
    %v234 = vunpack.c.l.b16 %v118
    %v235 = vunpack.c.h.b16 %v118
    %v236 = vunpack.c.l.b16 %v119
    %v237 = vunpack.c.h.b16 %v119
    %v238 = vunpack.c.l.b16 %v120
    %v239 = vunpack.c.h.b16 %v120
    %v240 = vunpack.c.l.b16 %v121
    %v241 = vunpack.c.h.b16 %v121
    %v242 = vunpack.c.l.b16 %v122
    %v243 = vunpack.c.h.b16 %v122
    %v244 = vunpack.c.l.b16 %v123
    %v245 = vunpack.c.h.b16 %v123
    %v246 = vunpack.c.l.b16 %v124
    %v247 = vunpack.c.h.b16 %v124
    %v248 = vunpack.c.l.b16 %v125
    %v249 = vunpack.c.h.b16 %v125
    %v250 = vunpack.c.l.b16 %v126
    %v251 = vunpack.c.h.b16 %v126
    %v252 = vunpack.c.l.b16 %v127
    %v253 = vunpack.c.h.b16 %v127
    %v254 = vunpack.c.l.b16 %v128
    %v255 = vunpack.c.h.b16 %v128
    %v256 = vunpack.c.l.b16 %v129
    %v257 = vunpack.c.h.b16 %v129
    %v258 = vunpack.c.l.b16 %v130
    %v259 = vunpack.c.h.b16 %v130
    %v260 = vunpack.c.l.b16 %v131
    %v261 = vunpack.c.h.b16 %v131
    %v262 = vunpack.c.l.b16 %v132
    %v263 = vunpack.c.h.b16 %v132
    %v264 = vunpack.c.l.b16 %v133
    %v265 = vunpack.c.h.b16 %v133
    %v266 = vpack.c.b16 %v204, %v202
    %v267 = vpack.c.b16 %v205, %v203
    %v268 = vpack.c.b16 %v208, %v206
    %v269 = vpack.c.b16 %v209, %v207
    %v270 = vpack.c.b16 %v212, %v210
    %v271 = vpack.c.b16 %v213, %v211
    %v272 = vpack.c.b16 %v216, %v214
    %v273 = vpack.c.b16 %v217, %v215
    %v274 = vpack.c.b16 %v220, %v218
    %v275 = vpack.c.b16 %v221, %v219
    %v276 = vpack.c.b16 %v224, %v222
    %v277 = vpack.c.b16 %v225, %v223
    %v278 = vpack.c.b16 %v228, %v226
    %v279 = vpack.c.b16 %v229, %v227
    %v280 = vpack.c.b16 %v232, %v230
    %v281 = vpack.c.b16 %v233, %v231
    %v282 = vpack.c.b16 %v236, %v234
    %v283 = vpack.c.b16 %v237, %v235
    %v284 = vpack.c.b16 %v240, %v238
    %v285 = vpack.c.b16 %v241, %v239
    %v286 = vpack.c.b16 %v244, %v242
    %v287 = vpack.c.b16 %v245, %v243
    %v288 = vpack.c.b16 %v248, %v246
    %v289 = vpack.c.b16 %v249, %v247
    %v290 = vpack.c.b16 %v252, %v250
    %v291 = vpack.c.b16 %v253, %v251
    %v292 = vpack.c.b16 %v256, %v254
    %v293 = vpack.c.b16 %v257, %v255
    %v294 = vpack.c.b16 %v260, %v258
    %v295 = vpack.c.b16 %v261, %v259
    %v296 = vpack.c.b16 %v264, %v262
    %v297 = vpack.c.b16 %v265, %v263
    %v362 = vunpack.c.l.b16 %v138
    %v363 = vunpack.c.l.b16 %v139
    %v364 = vunpack.c.l.b16 %v140
    %v365 = vunpack.c.l.b16 %v141
    %v366 = vunpack.c.l.b16 %v142
    %v367 = vunpack.c.l.b16 %v143
    %v368 = vunpack.c.l.b16 %v144
    %v369 = vunpack.c.l.b16 %v145
    %v370 = vunpack.c.l.b16 %v146
    %v371 = vunpack.c.l.b16 %v147
    %v372 = vunpack.c.l.b16 %v148
    %v373 = vunpack.c.l.b16 %v149
    %v374 = vunpack.c.l.b16 %v150
    %v375 = vunpack.c.l.b16 %v151
    %v376 = vunpack.c.l.b16 %v152
    %v377 = vunpack.c.l.b16 %v153
    %v378 = vunpack.c.l.b16 %v154
    %v379 = vunpack.c.l.b16 %v155
    %v380 = vunpack.c.l.b16 %v156
    %v381 = vunpack.c.l.b16 %v157
    %v382 = vunpack.c.l.b16 %v158
    %v383 = vunpack.c.l.b16 %v159
    %v384 = vunpack.c.l.b16 %v160
    %v385 = vunpack.c.l.b16 %v161
    %v386 = vunpack.c.l.b16 %v162
    %v387 = vunpack.c.l.b16 %v163
    %v388 = vunpack.c.l.b16 %v164
    %v389 = vunpack.c.l.b16 %v165
    %v390 = vunpack.c.l.b16 %v166
    %v391 = vunpack.c.l.b16 %v167
    %v392 = vunpack.c.l.b16 %v168
    %v393 = vunpack.c.l.b16 %v169
    %v394 = vpack.c.b16 %v363, %v362
    %v395 = vpack.c.b16 %v365, %v364
    %v396 = vpack.c.b16 %v367, %v366
    %v397 = vpack.c.b16 %v369, %v368
    %v398 = vpack.c.b16 %v371, %v370
    %v399 = vpack.c.b16 %v373, %v372
    %v400 = vpack.c.b16 %v375, %v374
    %v401 = vpack.c.b16 %v377, %v376
    %v402 = vpack.c.b16 %v379, %v378
    %v403 = vpack.c.b16 %v381, %v380
    %v404 = vpack.c.b16 %v383, %v382
    %v405 = vpack.c.b16 %v385, %v384
    %v406 = vpack.c.b16 %v387, %v386
    %v407 = vpack.c.b16 %v389, %v388
    %v408 = vpack.c.b16 %v391, %v390
    %v409 = vpack.c.b16 %v393, %v392
    %426 = vmatprep.subr.bf16.mxu0 0
    %427 = vmatpush1.bf16.msra.mxu0 %v394
    %428 = vmatprep.subr.bf16.mxu0 0
    %429 = vmatpush1.bf16.msra.mxu0 %v395
    %430 = vmatprep.subr.bf16.mxu0 0
    %431 = vmatpush1.bf16.msra.mxu0 %v396
    %432 = vmatprep.subr.bf16.mxu0 0
    %433 = vmatpush1.bf16.msra.mxu0 %v397
    %434 = vmatprep.subr.bf16.mxu0 0
    %435 = vmatpush1.bf16.msra.mxu0 %v398
    %436 = vmatprep.subr.bf16.mxu0 0
    %437 = vmatpush1.bf16.msra.mxu0 %v399
    %438 = vmatprep.subr.bf16.mxu0 0
    %439 = vmatpush1.bf16.msra.mxu0 %v400
    %440 = vmatprep.subr.bf16.mxu0 0
    %441 = vmatpush1.bf16.msra.mxu0 %v401
    %442 = vmatprep.subr.bf16.mxu0 0
    %443 = vmatpush1.bf16.msra.mxu0 %v402
    %444 = vmatprep.subr.bf16.mxu0 0
    %445 = vmatpush1.bf16.msra.mxu0 %v403
    %446 = vmatprep.subr.bf16.mxu0 0
    %447 = vmatpush1.bf16.msra.mxu0 %v404
    %448 = vmatprep.subr.bf16.mxu0 0
    %449 = vmatpush1.bf16.msra.mxu0 %v405
    %450 = vmatprep.subr.bf16.mxu0 0
    %451 = vmatpush1.bf16.msra.mxu0 %v406
    %452 = vmatprep.subr.bf16.mxu0 0
    %453 = vmatpush1.bf16.msra.mxu0 %v407
    %454 = vmatprep.subr.bf16.mxu0 0
    %455 = vmatpush1.bf16.msra.mxu0 %v408
    %456 = vmatprep.subr.bf16.mxu0 0
    %457 = vmatpush1.bf16.msra.mxu0 %v409
    %458 = vmatprep.mubr.bf16.mxu0 %v267
    %459 = vmatmul.mubr.bf16.gmra.mrb[0].mxu0 %v266
    %v460 = vpop.f32.mrb[0].mxu0
    %v461 = vadd.f32 0.0, %v460
    %v462 = vpop.f32.mrb[0].mxu0
    %v463 = vpop.f32.mrb[0].mxu0
    %v464 = vadd.f32 0.0, %v463
    %v465 = vpop.f32.mrb[0].mxu0
    %466 = vmatprep.mubr.bf16.mxu0 %v269
    %467 = vmatmul.mubr.bf16.gmra.mrb[0].mxu0 %v268
    %v468 = vpop.f32.mrb[0].mxu0
    %v469 = vadd.f32 0.0, %v468
    %v470 = vpop.f32.mrb[0].mxu0
    %v471 = vpop.f32.mrb[0].mxu0
    %v472 = vadd.f32 0.0, %v471
    %v473 = vpop.f32.mrb[0].mxu0
    %474 = vmatprep.mubr.bf16.mxu0 %v271
    %475 = vmatmul.mubr.bf16.gmra.mrb[0].mxu0 %v270
    %v476 = vpop.f32.mrb[0].mxu0
    %v477 = vadd.f32 0.0, %v476
    %v478 = vpop.f32.mrb[0].mxu0
    %v479 = vpop.f32.mrb[0].mxu0
    %v480 = vadd.f32 0.0, %v479
    %v481 = vpop.f32.mrb[0].mxu0
    %482 = vmatprep.mubr.bf16.mxu0 %v273
    %483 = vmatmul.mubr.bf16.gmra.mrb[0].mxu0 %v272
    %v484 = vpop.f32.mrb[0].mxu0
    %v485 = vadd.f32 0.0, %v484
    %v486 = vpop.f32.mrb[0].mxu0
    %v487 = vpop.f32.mrb[0].mxu0
    %v488 = vadd.f32 0.0, %v487
    %v489 = vpop.f32.mrb[0].mxu0
    %490 = vmatprep.mubr.bf16.mxu0 %v275
    %491 = vmatmul.mubr.bf16.gmra.mrb[0].mxu0 %v274
    %v492 = vpop.f32.mrb[0].mxu0
    %v493 = vadd.f32 0.0, %v492
    %v494 = vpop.f32.mrb[0].mxu0
    %v495 = vpop.f32.mrb[0].mxu0
    %v496 = vadd.f32 0.0, %v495
    %v497 = vpop.f32.mrb[0].mxu0
    %498 = vmatprep.mubr.bf16.mxu0 %v277
    %499 = vmatmul.mubr.bf16.gmra.mrb[0].mxu0 %v276
    %v500 = vpop.f32.mrb[0].mxu0
    %v501 = vadd.f32 0.0, %v500
    %v502 = vpop.f32.mrb[0].mxu0
    %v503 = vpop.f32.mrb[0].mxu0
    %v504 = vadd.f32 0.0, %v503
    %v505 = vpop.f32.mrb[0].mxu0
    %506 = vmatprep.mubr.bf16.mxu0 %v279
    %507 = vmatmul.mubr.bf16.gmra.mrb[0].mxu0 %v278
    %v508 = vpop.f32.mrb[0].mxu0
    %v509 = vadd.f32 0.0, %v508
    %v510 = vpop.f32.mrb[0].mxu0
    %v511 = vpop.f32.mrb[0].mxu0
    %v512 = vadd.f32 0.0, %v511
    %v513 = vpop.f32.mrb[0].mxu0
    %514 = vmatprep.mubr.bf16.mxu0 %v281
    %515 = vmatmul.mubr.bf16.gmra.mrb[0].mxu0 %v280
    %v516 = vpop.f32.mrb[0].mxu0
    %v517 = vadd.f32 0.0, %v516
    %v518 = vpop.f32.mrb[0].mxu0
    %v519 = vpop.f32.mrb[0].mxu0
    %v520 = vadd.f32 0.0, %v519
    %v521 = vpop.f32.mrb[0].mxu0
    %522 = vmatprep.mubr.bf16.mxu0 %v283
    %523 = vmatmul.mubr.bf16.gmra.mrb[0].mxu0 %v282
    %v524 = vpop.f32.mrb[0].mxu0
    %v525 = vadd.f32 0.0, %v524
    %v526 = vpop.f32.mrb[0].mxu0
    %v527 = vpop.f32.mrb[0].mxu0
    %v528 = vadd.f32 0.0, %v527
    %v529 = vpop.f32.mrb[0].mxu0
    %530 = vmatprep.mubr.bf16.mxu0 %v285
    %531 = vmatmul.mubr.bf16.gmra.mrb[0].mxu0 %v284
    %v532 = vpop.f32.mrb[0].mxu0
    %v533 = vadd.f32 0.0, %v532
    %v534 = vpop.f32.mrb[0].mxu0
    %v535 = vpop.f32.mrb[0].mxu0
    %v536 = vadd.f32 0.0, %v535
    %v537 = vpop.f32.mrb[0].mxu0
    %538 = vmatprep.mubr.bf16.mxu0 %v287
    %539 = vmatmul.mubr.bf16.gmra.mrb[0].mxu0 %v286
    %v540 = vpop.f32.mrb[0].mxu0
    %v541 = vadd.f32 0.0, %v540
    %v542 = vpop.f32.mrb[0].mxu0
    %v543 = vpop.f32.mrb[0].mxu0
    %v544 = vadd.f32 0.0, %v543
    %v545 = vpop.f32.mrb[0].mxu0
    %546 = vmatprep.mubr.bf16.mxu0 %v289
    %547 = vmatmul.mubr.bf16.gmra.mrb[0].mxu0 %v288
    %v548 = vpop.f32.mrb[0].mxu0
    %v549 = vadd.f32 0.0, %v548
    %v550 = vpop.f32.mrb[0].mxu0
    %v551 = vpop.f32.mrb[0].mxu0
    %v552 = vadd.f32 0.0, %v551
    %v553 = vpop.f32.mrb[0].mxu0
    %554 = vmatprep.mubr.bf16.mxu0 %v291
    %555 = vmatmul.mubr.bf16.gmra.mrb[0].mxu0 %v290
    %v556 = vpop.f32.mrb[0].mxu0
    %v557 = vadd.f32 0.0, %v556
    %v558 = vpop.f32.mrb[0].mxu0
    %v559 = vpop.f32.mrb[0].mxu0
    %v560 = vadd.f32 0.0, %v559
    %v561 = vpop.f32.mrb[0].mxu0
    %562 = vmatprep.mubr.bf16.mxu0 %v293
    %563 = vmatmul.mubr.bf16.gmra.mrb[0].mxu0 %v292
    %v564 = vpop.f32.mrb[0].mxu0
    %v565 = vadd.f32 0.0, %v564
    %v566 = vpop.f32.mrb[0].mxu0
    %v567 = vpop.f32.mrb[0].mxu0
    %v568 = vadd.f32 0.0, %v567
    %v569 = vpop.f32.mrb[0].mxu0
    %570 = vmatprep.mubr.bf16.mxu0 %v295
    %571 = vmatmul.mubr.bf16.gmra.mrb[0].mxu0 %v294
    %v572 = vpop.f32.mrb[0].mxu0
    %v573 = vadd.f32 0.0, %v572
    %v574 = vpop.f32.mrb[0].mxu0
    %v575 = vpop.f32.mrb[0].mxu0
    %v576 = vadd.f32 0.0, %v575
    %v577 = vpop.f32.mrb[0].mxu0
    %578 = vmatprep.mubr.bf16.mxu0 %v297
    %579 = vmatmul.mubr.bf16.gmra.mrb[0].mxu0 %v296
    %v580 = vpop.f32.mrb[0].mxu0
    %v581 = vadd.f32 0.0, %v580
    %v582 = vpop.f32.mrb[0].mxu0
    %v583 = vpop.f32.mrb[0].mxu0
    %v584 = vadd.f32 0.0, %v583
    %v585 = vpop.f32.mrb[0].mxu0
    %586 = vdwg.mxu0
    %v587 = vadd.f32 %v70, %v461
    %v588 = vadd.f32 %v71, %v464
    %v589 = vadd.f32 %v72, %v469
    %v590 = vadd.f32 %v73, %v472
    %v591 = vadd.f32 %v74, %v477
    %v592 = vadd.f32 %v75, %v480
    %v593 = vadd.f32 %v76, %v485
    %v594 = vadd.f32 %v77, %v488
    %v595 = vadd.f32 %v78, %v493
    %v596 = vadd.f32 %v79, %v496
    %v597 = vadd.f32 %v80, %v501
    %v598 = vadd.f32 %v81, %v504
    %v599 = vadd.f32 %v82, %v509
    %v600 = vadd.f32 %v83, %v512
    %v601 = vadd.f32 %v84, %v517
    %v602 = vadd.f32 %v85, %v520
    %v603 = vadd.f32 %v86, %v525
    %v604 = vadd.f32 %v87, %v528
    %v605 = vadd.f32 %v88, %v533
    %v606 = vadd.f32 %v89, %v536
    %v607 = vadd.f32 %v90, %v541
    %v608 = vadd.f32 %v91, %v544
    %v609 = vadd.f32 %v92, %v549
    %v610 = vadd.f32 %v93, %v552
    %v611 = vadd.f32 %v94, %v557
    %v612 = vadd.f32 %v95, %v560
    %v613 = vadd.f32 %v96, %v565
    %v614 = vadd.f32 %v97, %v568
    %v615 = vadd.f32 %v98, %v573
    %v616 = vadd.f32 %v99, %v576
    %v617 = vadd.f32 %v100, %v581
    %v618 = vadd.f32 %v101, %v584
    %vm619 = vcmask 130048
    %620 = vst.msk [vmem:[#allocation2] sm:$0xff] %vm619, %v587
    %621 = vst.msk [vmem:[#allocation2 + $0x8] sm:$0xff] %vm619, %v588
    %622 = vst.msk [vmem:[#allocation2 + $0x10] sm:$0xff] %vm619, %v589
    %623 = vst.msk [vmem:[#allocation2 + $0x18] sm:$0xff] %vm619, %v590
    %624 = vst.msk [vmem:[#allocation2 + $0x20] sm:$0xff] %vm619, %v591
    %625 = vst.msk [vmem:[#allocation2 + $0x28] sm:$0xff] %vm619, %v592
    %626 = vst.msk [vmem:[#allocation2 + $0x30] sm:$0xff] %vm619, %v593
    %627 = vst.msk [vmem:[#allocation2 + $0x38] sm:$0xff] %vm619, %v594
    %628 = vst.msk [vmem:[#allocation2 + $0x40] sm:$0xff] %vm619, %v595
    %629 = vst.msk [vmem:[#allocation2 + $0x48] sm:$0xff] %vm619, %v596
    %630 = vst.msk [vmem:[#allocation2 + $0x50] sm:$0xff] %vm619, %v597
    %631 = vst.msk [vmem:[#allocation2 + $0x58] sm:$0xff] %vm619, %v598
    %632 = vst.msk [vmem:[#allocation2 + $0x60] sm:$0xff] %vm619, %v599
    %633 = vst.msk [vmem:[#allocation2 + $0x68] sm:$0xff] %vm619, %v600
    %634 = vst.msk [vmem:[#allocation2 + $0x70] sm:$0xff] %vm619, %v601
    %635 = vst.msk [vmem:[#allocation2 + $0x78] sm:$0xff] %vm619, %v602
    %636 = vst.msk [vmem:[#allocation2 + $0x80] sm:$0xff] %vm619, %v603
    %637 = vst.msk [vmem:[#allocation2 + $0x88] sm:$0xff] %vm619, %v604
    %638 = vst.msk [vmem:[#allocation2 + $0x90] sm:$0xff] %vm619, %v605
    %639 = vst.msk [vmem:[#allocation2 + $0x98] sm:$0xff] %vm619, %v606
    %640 = vst.msk [vmem:[#allocation2 + $0xa0] sm:$0xff] %vm619, %v607
    %641 = vst.msk [vmem:[#allocation2 + $0xa8] sm:$0xff] %vm619, %v608
    %642 = vst.msk [vmem:[#allocation2 + $0xb0] sm:$0xff] %vm619, %v609
    %643 = vst.msk [vmem:[#allocation2 + $0xb8] sm:$0xff] %vm619, %v610
    %644 = vst.msk [vmem:[#allocation2 + $0xc0] sm:$0xff] %vm619, %v611
    %645 = vst.msk [vmem:[#allocation2 + $0xc8] sm:$0xff] %vm619, %v612
    %646 = vst.msk [vmem:[#allocation2 + $0xd0] sm:$0xff] %vm619, %v613
    %647 = vst.msk [vmem:[#allocation2 + $0xd8] sm:$0xff] %vm619, %v614
    %648 = vst.msk [vmem:[#allocation2 + $0xe0] sm:$0xff] %vm619, %v615
    %649 = vst.msk [vmem:[#allocation2 + $0xe8] sm:$0xff] %vm619, %v616
    %650 = vst.msk [vmem:[#allocation2 + $0xf0] sm:$0xff] %vm619, %v617
    %651 = vst.msk [vmem:[#allocation2 + $0xf8] sm:$0xff] %vm619, %v618
    // Predicated region
    $region26: #{tpu_custom_call.1} parent=1 // pred_check
      %p652 = pneg %p32
    $region27: #{tpu_custom_call.1} parent=1 // pred_check_branch
      %654 = sbr.rel (%p652) target = $region29
    $region28: #{tpu_custom_call.1} parent=1 // pred_region
      %v655 = vld [vmem:[#allocation2] sm:$0xff]
      %v656 = vld [vmem:[#allocation2 + $0x8] sm:$0xff]
      %v657 = vld [vmem:[#allocation2 + $0x10] sm:$0xff]
      %v658 = vld [vmem:[#allocation2 + $0x18] sm:$0xff]
      %v659 = vld [vmem:[#allocation2 + $0x20] sm:$0xff]
      %v660 = vld [vmem:[#allocation2 + $0x28] sm:$0xff]
      %v661 = vld [vmem:[#allocation2 + $0x30] sm:$0xff]
      %v662 = vld [vmem:[#allocation2 + $0x38] sm:$0xff]
      %v663 = vld [vmem:[#allocation2 + $0x40] sm:$0xff]
      %v664 = vld [vmem:[#allocation2 + $0x48] sm:$0xff]
      %v665 = vld [vmem:[#allocation2 + $0x50] sm:$0xff]
      %v666 = vld [vmem:[#allocation2 + $0x58] sm:$0xff]
      %v667 = vld [vmem:[#allocation2 + $0x60] sm:$0xff]
      %v668 = vld [vmem:[#allocation2 + $0x68] sm:$0xff]
      %v669 = vld [vmem:[#allocation2 + $0x70] sm:$0xff]
      %v670 = vld [vmem:[#allocation2 + $0x78] sm:$0xff]
      %v671 = vld [vmem:[#allocation2 + $0x80] sm:$0xff]
      %v672 = vld [vmem:[#allocation2 + $0x88] sm:$0xff]
      %v673 = vld [vmem:[#allocation2 + $0x90] sm:$0xff]
      %v674 = vld [vmem:[#allocation2 + $0x98] sm:$0xff]
      %v675 = vld [vmem:[#allocation2 + $0xa0] sm:$0xff]
      %v676 = vld [vmem:[#allocation2 + $0xa8] sm:$0xff]
      %v677 = vld [vmem:[#allocation2 + $0xb0] sm:$0xff]
      %v678 = vld [vmem:[#allocation2 + $0xb8] sm:$0xff]
      %v679 = vld [vmem:[#allocation2 + $0xc0] sm:$0xff]
      %v680 = vld [vmem:[#allocation2 + $0xc8] sm:$0xff]
      %v681 = vld [vmem:[#allocation2 + $0xd0] sm:$0xff]
      %v682 = vld [vmem:[#allocation2 + $0xd8] sm:$0xff]
      %v683 = vld [vmem:[#allocation2 + $0xe0] sm:$0xff]
      %v684 = vld [vmem:[#allocation2 + $0xe8] sm:$0xff]
      %v685 = vld [vmem:[#allocation2 + $0xf0] sm:$0xff]
      %v686 = vld [vmem:[#allocation2 + $0xf8] sm:$0xff]
      %v687 = vpack.c.bf16 %v656, %v655
      %v688 = vpack.c.bf16 %v658, %v657
      %v689 = vpack.c.bf16 %v660, %v659
      %v690 = vpack.c.bf16 %v662, %v661
      %v691 = vpack.c.bf16 %v664, %v663
      %v692 = vpack.c.bf16 %v666, %v665
      %v693 = vpack.c.bf16 %v668, %v667
      %v694 = vpack.c.bf16 %v670, %v669
      %v695 = vpack.c.bf16 %v672, %v671
      %v696 = vpack.c.bf16 %v674, %v673
      %v697 = vpack.c.bf16 %v676, %v675
      %v698 = vpack.c.bf16 %v678, %v677
      %v699 = vpack.c.bf16 %v680, %v679
      %v700 = vpack.c.bf16 %v682, %v681
      %v701 = vpack.c.bf16 %v684, %v683
      %v702 = vpack.c.bf16 %v686, %v685
      %v703 = vld [vmem:[%s2] sm:$0xf]
      %v704 = vld [vmem:[%s2 + $0x4] sm:$0xf]
      %v705 = vld [vmem:[%s3] sm:$0x1]
      %v707 = vlaneseq
      %v708 = vshrl.u32 %v707, 7
      %v709 = vsub.s32 0, %v708
      %v710 = vrot.slane %v705, %v709
      %v714 = vunpack.c.l.b16 %v703
      %v715 = vunpack.c.l.b16 %v704
      %v716 = vpack.c.b16 %v715, %v714
      %v719 = vsel %vm619, %v687, 0
      %v722 = vsel %vm619, %v688, 0
      %v725 = vsel %vm619, %v689, 0
      %v728 = vsel %vm619, %v690, 0
      %v731 = vsel %vm619, %v691, 0
      %v734 = vsel %vm619, %v692, 0
      %v737 = vsel %vm619, %v693, 0
      %v740 = vsel %vm619, %v694, 0
      %v743 = vsel %vm619, %v695, 0
      %v746 = vsel %vm619, %v696, 0
      %v749 = vsel %vm619, %v697, 0
      %v752 = vsel %vm619, %v698, 0
      %v755 = vsel %vm619, %v699, 0
      %v758 = vsel %vm619, %v700, 0
      %v761 = vsel %vm619, %v701, 0
      %v764 = vsel %vm619, %v702, 0
      %766 = vmatprep.subr.bf16.mxu0 0
      %767 = vmatpush1.bf16.msra.mxu0 %v716
      %768 = vmatprep.subr.bf16.mxu0 0
      %769 = vmatpush1.bf16.msra.mxu0 0
      %770 = vmatprep.subr.bf16.mxu0 0
      %771 = vmatpush1.bf16.msra.mxu0 0
      %772 = vmatprep.subr.bf16.mxu0 0
      %773 = vmatpush1.bf16.msra.mxu0 0
      %774 = vmatprep.subr.bf16.mxu0 0
      %775 = vmatpush1.bf16.msra.mxu0 0
      %776 = vmatprep.subr.bf16.mxu0 0
      %777 = vmatpush1.bf16.msra.mxu0 0
      %778 = vmatprep.subr.bf16.mxu0 0
      %779 = vmatpush1.bf16.msra.mxu0 0
      %780 = vmatprep.subr.bf16.mxu0 0
      %781 = vmatpush1.bf16.msra.mxu0 0
      %782 = vmatprep.subr.bf16.mxu0 0
      %783 = vmatpush1.bf16.msra.mxu0 0
      %784 = vmatprep.subr.bf16.mxu0 0
      %785 = vmatpush1.bf16.msra.mxu0 0
      %786 = vmatprep.subr.bf16.mxu0 0
      %787 = vmatpush1.bf16.msra.mxu0 0
      %788 = vmatprep.subr.bf16.mxu0 0
      %789 = vmatpush1.bf16.msra.mxu0 0
      %790 = vmatprep.subr.bf16.mxu0 0
      %791 = vmatpush1.bf16.msra.mxu0 0
      %792 = vmatprep.subr.bf16.mxu0 0
      %793 = vmatpush1.bf16.msra.mxu0 0
      %794 = vmatprep.subr.bf16.mxu0 0
      %795 = vmatpush1.bf16.msra.mxu0 0
      %796 = vmatprep.subr.bf16.mxu0 0
      %797 = vmatpush1.bf16.msra.mxu0 0
      %798 = vmatprep.mubr.bf16.mxu0 0
      %799 = vmatmul.mubr.bf16.gmra.mrb[0].mxu0 %v719
      %v800 = vpop.f32.mrb[0].mxu0
      %v801 = vadd.f32 %v710, %v800
      %v802 = vpop.f32.mrb[0].mxu0
      %v803 = vpop.f32.mrb[0].mxu0
      %v804 = vadd.f32 %v710, %v803
      %v805 = vpop.f32.mrb[0].mxu0
      %806 = vmatprep.mubr.bf16.mxu0 0
      %807 = vmatmul.mubr.bf16.gmra.mrb[0].mxu0 %v722
      %v808 = vpop.f32.mrb[0].mxu0
      %v809 = vadd.f32 %v710, %v808
      %v810 = vpop.f32.mrb[0].mxu0
      %v811 = vpop.f32.mrb[0].mxu0
      %v812 = vadd.f32 %v710, %v811
      %v813 = vpop.f32.mrb[0].mxu0
      %814 = vmatprep.mubr.bf16.mxu0 0
      %815 = vmatmul.mubr.bf16.gmra.mrb[0].mxu0 %v725
      %v816 = vpop.f32.mrb[0].mxu0
      %v817 = vadd.f32 %v710, %v816
      %v818 = vpop.f32.mrb[0].mxu0
      %v819 = vpop.f32.mrb[0].mxu0
      %v820 = vadd.f32 %v710, %v819
      %v821 = vpop.f32.mrb[0].mxu0
      %822 = vmatprep.mubr.bf16.mxu0 0
      %823 = vmatmul.mubr.bf16.gmra.mrb[0].mxu0 %v728
      %v824 = vpop.f32.mrb[0].mxu0
      %v825 = vadd.f32 %v710, %v824
      %v826 = vpop.f32.mrb[0].mxu0
      %v827 = vpop.f32.mrb[0].mxu0
      %v828 = vadd.f32 %v710, %v827
      %v829 = vpop.f32.mrb[0].mxu0
      %830 = vmatprep.mubr.bf16.mxu0 0
      %831 = vmatmul.mubr.bf16.gmra.mrb[0].mxu0 %v731
      %v832 = vpop.f32.mrb[0].mxu0
      %v833 = vadd.f32 %v710, %v832
      %v834 = vpop.f32.mrb[0].mxu0
      %v835 = vpop.f32.mrb[0].mxu0
      %v836 = vadd.f32 %v710, %v835
      %v837 = vpop.f32.mrb[0].mxu0
      %838 = vmatprep.mubr.bf16.mxu0 0
      %839 = vmatmul.mubr.bf16.gmra.mrb[0].mxu0 %v734
      %v840 = vpop.f32.mrb[0].mxu0
      %v841 = vadd.f32 %v710, %v840
      %v842 = vpop.f32.mrb[0].mxu0
      %v843 = vpop.f32.mrb[0].mxu0
      %v844 = vadd.f32 %v710, %v843
      %v845 = vpop.f32.mrb[0].mxu0
      %846 = vmatprep.mubr.bf16.mxu0 0
      %847 = vmatmul.mubr.bf16.gmra.mrb[0].mxu0 %v737
      %v848 = vpop.f32.mrb[0].mxu0
      %v849 = vadd.f32 %v710, %v848
      %v850 = vpop.f32.mrb[0].mxu0
      %v851 = vpop.f32.mrb[0].mxu0
      %v852 = vadd.f32 %v710, %v851
      %v853 = vpop.f32.mrb[0].mxu0
      %854 = vmatprep.mubr.bf16.mxu0 0
      %855 = vmatmul.mubr.bf16.gmra.mrb[0].mxu0 %v740
      %v856 = vpop.f32.mrb[0].mxu0
      %v857 = vadd.f32 %v710, %v856
      %v858 = vpop.f32.mrb[0].mxu0
      %v859 = vpop.f32.mrb[0].mxu0
      %v860 = vadd.f32 %v710, %v859
      %v861 = vpop.f32.mrb[0].mxu0
      %862 = vmatprep.mubr.bf16.mxu0 0
      %863 = vmatmul.mubr.bf16.gmra.mrb[0].mxu0 %v743
      %v864 = vpop.f32.mrb[0].mxu0
      %v865 = vadd.f32 %v710, %v864
      %v866 = vpop.f32.mrb[0].mxu0
      %v867 = vpop.f32.mrb[0].mxu0
      %v868 = vadd.f32 %v710, %v867
      %v869 = vpop.f32.mrb[0].mxu0
      %870 = vmatprep.mubr.bf16.mxu0 0
      %871 = vmatmul.mubr.bf16.gmra.mrb[0].mxu0 %v746
      %v872 = vpop.f32.mrb[0].mxu0
      %v873 = vadd.f32 %v710, %v872
      %v874 = vpop.f32.mrb[0].mxu0
      %v875 = vpop.f32.mrb[0].mxu0
      %v876 = vadd.f32 %v710, %v875
      %v877 = vpop.f32.mrb[0].mxu0
      %878 = vmatprep.mubr.bf16.mxu0 0
      %879 = vmatmul.mubr.bf16.gmra.mrb[0].mxu0 %v749
      %v880 = vpop.f32.mrb[0].mxu0
      %v881 = vadd.f32 %v710, %v880
      %v882 = vpop.f32.mrb[0].mxu0
      %v883 = vpop.f32.mrb[0].mxu0
      %v884 = vadd.f32 %v710, %v883
      %v885 = vpop.f32.mrb[0].mxu0
      %886 = vmatprep.mubr.bf16.mxu0 0
      %887 = vmatmul.mubr.bf16.gmra.mrb[0].mxu0 %v752
      %v888 = vpop.f32.mrb[0].mxu0
      %v889 = vadd.f32 %v710, %v888
      %v890 = vpop.f32.mrb[0].mxu0
      %v891 = vpop.f32.mrb[0].mxu0
      %v892 = vadd.f32 %v710, %v891
      %v893 = vpop.f32.mrb[0].mxu0
      %894 = vmatprep.mubr.bf16.mxu0 0
      %895 = vmatmul.mubr.bf16.gmra.mrb[0].mxu0 %v755
      %v896 = vpop.f32.mrb[0].mxu0
      %v897 = vadd.f32 %v710, %v896
      %v898 = vpop.f32.mrb[0].mxu0
      %v899 = vpop.f32.mrb[0].mxu0
      %v900 = vadd.f32 %v710, %v899
      %v901 = vpop.f32.mrb[0].mxu0
      %902 = vmatprep.mubr.bf16.mxu0 0
      %903 = vmatmul.mubr.bf16.gmra.mrb[0].mxu0 %v758
      %v904 = vpop.f32.mrb[0].mxu0
      %v905 = vadd.f32 %v710, %v904
      %v906 = vpop.f32.mrb[0].mxu0
      %v907 = vpop.f32.mrb[0].mxu0
      %v908 = vadd.f32 %v710, %v907
      %v909 = vpop.f32.mrb[0].mxu0
      %910 = vmatprep.mubr.bf16.mxu0 0
      %911 = vmatmul.mubr.bf16.gmra.mrb[0].mxu0 %v761
      %v912 = vpop.f32.mrb[0].mxu0
      %v913 = vadd.f32 %v710, %v912
      %v914 = vpop.f32.mrb[0].mxu0
      %v915 = vpop.f32.mrb[0].mxu0
      %v916 = vadd.f32 %v710, %v915
      %v917 = vpop.f32.mrb[0].mxu0
      %918 = vmatprep.mubr.bf16.mxu0 0
      %919 = vmatmul.mubr.bf16.gmra.mrb[0].mxu0 %v764
      %v920 = vpop.f32.mrb[0].mxu0
      %v921 = vadd.f32 %v710, %v920
      %v922 = vpop.f32.mrb[0].mxu0
      %v923 = vpop.f32.mrb[0].mxu0
      %v924 = vadd.f32 %v710, %v923
      %v925 = vpop.f32.mrb[0].mxu0
      %926 = vdwg.mxu0
      %v927 = vtanh.pop %v801
      %v928 = vtanh.pop %v804
      %v929 = vtanh.pop %v809
      %v930 = vtanh.pop %v812
      %v931 = vtanh.pop %v817
      %v932 = vtanh.pop %v820
      %v933 = vtanh.pop %v825
      %v934 = vtanh.pop %v828
      %v935 = vtanh.pop %v833
      %v936 = vtanh.pop %v836
      %v937 = vtanh.pop %v841
      %v938 = vtanh.pop %v844
      %v939 = vtanh.pop %v849
      %v940 = vtanh.pop %v852
      %v941 = vtanh.pop %v857
      %v942 = vtanh.pop %v860
      %v943 = vtanh.pop %v865
      %v944 = vtanh.pop %v868
      %v945 = vtanh.pop %v873
      %v946 = vtanh.pop %v876
      %v947 = vtanh.pop %v881
      %v948 = vtanh.pop %v884
      %v949 = vtanh.pop %v889
      %v950 = vtanh.pop %v892
      %v951 = vtanh.pop %v897
      %v952 = vtanh.pop %v900
      %v953 = vtanh.pop %v905
      %v954 = vtanh.pop %v908
      %v955 = vtanh.pop %v913
      %v956 = vtanh.pop %v916
      %v957 = vtanh.pop %v921
      %v958 = vtanh.pop %v924
      %v959 = vpack.c.bf16 %v928, %v927
      %v960 = vpack.c.bf16 %v930, %v929
      %v961 = vpack.c.bf16 %v932, %v931
      %v962 = vpack.c.bf16 %v934, %v933
      %v963 = vpack.c.bf16 %v936, %v935
      %v964 = vpack.c.bf16 %v938, %v937
      %v965 = vpack.c.bf16 %v940, %v939
      %v966 = vpack.c.bf16 %v942, %v941
      %v967 = vpack.c.bf16 %v944, %v943
      %v968 = vpack.c.bf16 %v946, %v945
      %v969 = vpack.c.bf16 %v948, %v947
      %v970 = vpack.c.bf16 %v950, %v949
      %v971 = vpack.c.bf16 %v952, %v951
      %v972 = vpack.c.bf16 %v954, %v953
      %v973 = vpack.c.bf16 %v956, %v955
      %v974 = vpack.c.bf16 %v958, %v957
      %s975 = scalar_lea.vmem %s2, 8
      %v976 = vld [vmem:[%s975] sm:$0xf]
      %v977 = vld [vmem:[%s975 + $0x4] sm:$0xf]
      %s978 = scalar_lea.vmem %s3, 1
      %v979 = vld [vmem:[%s978] sm:$0x1]
      %v981 = vlaneseq
      %v982 = vshrl.u32 %v981, 7
      %v983 = vsub.s32 0, %v982
      %v984 = vrot.slane %v979, %v983
      %v988 = vunpack.c.l.b16 %v976
      %v989 = vunpack.c.l.b16 %v977
      %v990 = vpack.c.b16 %v989, %v988
      %v993 = vsel %vm619, %v959, 0
      %v996 = vsel %vm619, %v960, 0
      %v999 = vsel %vm619, %v961, 0
      %v1002 = vsel %vm619, %v962, 0
      %v1005 = vsel %vm619, %v963, 0
      %v1008 = vsel %vm619, %v964, 0
      %v1011 = vsel %vm619, %v965, 0
      %v1014 = vsel %vm619, %v966, 0
      %v1017 = vsel %vm619, %v967, 0
      %v1020 = vsel %vm619, %v968, 0
      %v1023 = vsel %vm619, %v969, 0
      %v1026 = vsel %vm619, %v970, 0
      %v1029 = vsel %vm619, %v971, 0
      %v1032 = vsel %vm619, %v972, 0
      %v1035 = vsel %vm619, %v973, 0
      %v1038 = vsel %vm619, %v974, 0
      %1040 = vmatprep.subr.bf16.mxu0 0
      %1041 = vmatpush1.bf16.msra.mxu0 %v990
      %1042 = vmatprep.subr.bf16.mxu0 0
      %1043 = vmatpush1.bf16.msra.mxu0 0
      %1044 = vmatprep.subr.bf16.mxu0 0
      %1045 = vmatpush1.bf16.msra.mxu0 0
      %1046 = vmatprep.subr.bf16.mxu0 0
      %1047 = vmatpush1.bf16.msra.mxu0 0
      %1048 = vmatprep.subr.bf16.mxu0 0
      %1049 = vmatpush1.bf16.msra.mxu0 0
      %1050 = vmatprep.subr.bf16.mxu0 0
      %1051 = vmatpush1.bf16.msra.mxu0 0
      %1052 = vmatprep.subr.bf16.mxu0 0
      %1053 = vmatpush1.bf16.msra.mxu0 0
      %1054 = vmatprep.subr.bf16.mxu0 0
      %1055 = vmatpush1.bf16.msra.mxu0 0
      %1056 = vmatprep.subr.bf16.mxu0 0
      %1057 = vmatpush1.bf16.msra.mxu0 0
      %1058 = vmatprep.subr.bf16.mxu0 0
      %1059 = vmatpush1.bf16.msra.mxu0 0
      %1060 = vmatprep.subr.bf16.mxu0 0
      %1061 = vmatpush1.bf16.msra.mxu0 0
      %1062 = vmatprep.subr.bf16.mxu0 0
      %1063 = vmatpush1.bf16.msra.mxu0 0
      %1064 = vmatprep.subr.bf16.mxu0 0
      %1065 = vmatpush1.bf16.msra.mxu0 0
      %1066 = vmatprep.subr.bf16.mxu0 0
      %1067 = vmatpush1.bf16.msra.mxu0 0
      %1068 = vmatprep.subr.bf16.mxu0 0
      %1069 = vmatpush1.bf16.msra.mxu0 0
      %1070 = vmatprep.subr.bf16.mxu0 0
      %1071 = vmatpush1.bf16.msra.mxu0 0
      %1072 = vmatprep.mubr.bf16.mxu0 0
      %1073 = vmatmul.mubr.bf16.gmra.mrb[0].mxu0 %v993
      %v1074 = vpop.f32.mrb[0].mxu0
      %v1075 = vadd.f32 %v984, %v1074
      %v1076 = vpop.f32.mrb[0].mxu0
      %v1077 = vpop.f32.mrb[0].mxu0
      %v1078 = vadd.f32 %v984, %v1077
      %v1079 = vpop.f32.mrb[0].mxu0
      %1080 = vmatprep.mubr.bf16.mxu0 0
      %1081 = vmatmul.mubr.bf16.gmra.mrb[0].mxu0 %v996
      %v1082 = vpop.f32.mrb[0].mxu0
      %v1083 = vadd.f32 %v984, %v1082
      %v1084 = vpop.f32.mrb[0].mxu0
      %v1085 = vpop.f32.mrb[0].mxu0
      %v1086 = vadd.f32 %v984, %v1085
      %v1087 = vpop.f32.mrb[0].mxu0
      %1088 = vmatprep.mubr.bf16.mxu0 0
      %1089 = vmatmul.mubr.bf16.gmra.mrb[0].mxu0 %v999
      %v1090 = vpop.f32.mrb[0].mxu0
      %v1091 = vadd.f32 %v984, %v1090
      %v1092 = vpop.f32.mrb[0].mxu0
      %v1093 = vpop.f32.mrb[0].mxu0
      %v1094 = vadd.f32 %v984, %v1093
      %v1095 = vpop.f32.mrb[0].mxu0
      %1096 = vmatprep.mubr.bf16.mxu0 0
      %1097 = vmatmul.mubr.bf16.gmra.mrb[0].mxu0 %v1002
      %v1098 = vpop.f32.mrb[0].mxu0
      %v1099 = vadd.f32 %v984, %v1098
      %v1100 = vpop.f32.mrb[0].mxu0
      %v1101 = vpop.f32.mrb[0].mxu0
      %v1102 = vadd.f32 %v984, %v1101
      %v1103 = vpop.f32.mrb[0].mxu0
      %1104 = vmatprep.mubr.bf16.mxu0 0
      %1105 = vmatmul.mubr.bf16.gmra.mrb[0].mxu0 %v1005
      %v1106 = vpop.f32.mrb[0].mxu0
      %v1107 = vadd.f32 %v984, %v1106
      %v1108 = vpop.f32.mrb[0].mxu0
      %v1109 = vpop.f32.mrb[0].mxu0
      %v1110 = vadd.f32 %v984, %v1109
      %v1111 = vpop.f32.mrb[0].mxu0
      %1112 = vmatprep.mubr.bf16.mxu0 0
      %1113 = vmatmul.mubr.bf16.gmra.mrb[0].mxu0 %v1008
      %v1114 = vpop.f32.mrb[0].mxu0
      %v1115 = vadd.f32 %v984, %v1114
      %v1116 = vpop.f32.mrb[0].mxu0
      %v1117 = vpop.f32.mrb[0].mxu0
      %v1118 = vadd.f32 %v984, %v1117
      %v1119 = vpop.f32.mrb[0].mxu0
      %1120 = vmatprep.mubr.bf16.mxu0 0
      %1121 = vmatmul.mubr.bf16.gmra.mrb[0].mxu0 %v1011
      %v1122 = vpop.f32.mrb[0].mxu0
      %v1123 = vadd.f32 %v984, %v1122
      %v1124 = vpop.f32.mrb[0].mxu0
      %v1125 = vpop.f32.mrb[0].mxu0
      %v1126 = vadd.f32 %v984, %v1125
      %v1127 = vpop.f32.mrb[0].mxu0
      %1128 = vmatprep.mubr.bf16.mxu0 0
      %1129 = vmatmul.mubr.bf16.gmra.mrb[0].mxu0 %v1014
      %v1130 = vpop.f32.mrb[0].mxu0
      %v1131 = vadd.f32 %v984, %v1130
      %v1132 = vpop.f32.mrb[0].mxu0
      %v1133 = vpop.f32.mrb[0].mxu0
      %v1134 = vadd.f32 %v984, %v1133
      %v1135 = vpop.f32.mrb[0].mxu0
      %1136 = vmatprep.mubr.bf16.mxu0 0
      %1137 = vmatmul.mubr.bf16.gmra.mrb[0].mxu0 %v1017
      %v1138 = vpop.f32.mrb[0].mxu0
      %v1139 = vadd.f32 %v984, %v1138
      %v1140 = vpop.f32.mrb[0].mxu0
      %v1141 = vpop.f32.mrb[0].mxu0
      %v1142 = vadd.f32 %v984, %v1141
      %v1143 = vpop.f32.mrb[0].mxu0
      %1144 = vmatprep.mubr.bf16.mxu0 0
      %1145 = vmatmul.mubr.bf16.gmra.mrb[0].mxu0 %v1020
      %v1146 = vpop.f32.mrb[0].mxu0
      %v1147 = vadd.f32 %v984, %v1146
      %v1148 = vpop.f32.mrb[0].mxu0
      %v1149 = vpop.f32.mrb[0].mxu0
      %v1150 = vadd.f32 %v984, %v1149
      %v1151 = vpop.f32.mrb[0].mxu0
      %1152 = vmatprep.mubr.bf16.mxu0 0
      %1153 = vmatmul.mubr.bf16.gmra.mrb[0].mxu0 %v1023
      %v1154 = vpop.f32.mrb[0].mxu0
      %v1155 = vadd.f32 %v984, %v1154
      %v1156 = vpop.f32.mrb[0].mxu0
      %v1157 = vpop.f32.mrb[0].mxu0
      %v1158 = vadd.f32 %v984, %v1157
      %v1159 = vpop.f32.mrb[0].mxu0
      %1160 = vmatprep.mubr.bf16.mxu0 0
      %1161 = vmatmul.mubr.bf16.gmra.mrb[0].mxu0 %v1026
      %v1162 = vpop.f32.mrb[0].mxu0
      %v1163 = vadd.f32 %v984, %v1162
      %v1164 = vpop.f32.mrb[0].mxu0
      %v1165 = vpop.f32.mrb[0].mxu0
      %v1166 = vadd.f32 %v984, %v1165
      %v1167 = vpop.f32.mrb[0].mxu0
      %1168 = vmatprep.mubr.bf16.mxu0 0
      %1169 = vmatmul.mubr.bf16.gmra.mrb[0].mxu0 %v1029
      %v1170 = vpop.f32.mrb[0].mxu0
      %v1171 = vadd.f32 %v984, %v1170
      %v1172 = vpop.f32.mrb[0].mxu0
      %v1173 = vpop.f32.mrb[0].mxu0
      %v1174 = vadd.f32 %v984, %v1173
      %v1175 = vpop.f32.mrb[0].mxu0
      %1176 = vmatprep.mubr.bf16.mxu0 0
      %1177 = vmatmul.mubr.bf16.gmra.mrb[0].mxu0 %v1032
      %v1178 = vpop.f32.mrb[0].mxu0
      %v1179 = vadd.f32 %v984, %v1178
      %v1180 = vpop.f32.mrb[0].mxu0
      %v1181 = vpop.f32.mrb[0].mxu0
      %v1182 = vadd.f32 %v984, %v1181
      %v1183 = vpop.f32.mrb[0].mxu0
      %1184 = vmatprep.mubr.bf16.mxu0 0
      %1185 = vmatmul.mubr.bf16.gmra.mrb[0].mxu0 %v1035
      %v1186 = vpop.f32.mrb[0].mxu0
      %v1187 = vadd.f32 %v984, %v1186
      %v1188 = vpop.f32.mrb[0].mxu0
      %v1189 = vpop.f32.mrb[0].mxu0
      %v1190 = vadd.f32 %v984, %v1189
      %v1191 = vpop.f32.mrb[0].mxu0
      %1192 = vmatprep.mubr.bf16.mxu0 0
      %1193 = vmatmul.mubr.bf16.gmra.mrb[0].mxu0 %v1038
      %v1194 = vpop.f32.mrb[0].mxu0
      %v1195 = vadd.f32 %v984, %v1194
      %v1196 = vpop.f32.mrb[0].mxu0
      %v1197 = vpop.f32.mrb[0].mxu0
      %v1198 = vadd.f32 %v984, %v1197
      %v1199 = vpop.f32.mrb[0].mxu0
      %1200 = vdwg.mxu0
      %v1201 = vtanh.pop %v1075
      %v1202 = vtanh.pop %v1078
      %v1203 = vtanh.pop %v1083
      %v1204 = vtanh.pop %v1086
      %v1205 = vtanh.pop %v1091
      %v1206 = vtanh.pop %v1094
      %v1207 = vtanh.pop %v1099
      %v1208 = vtanh.pop %v1102
      %v1209 = vtanh.pop %v1107
      %v1210 = vtanh.pop %v1110
      %v1211 = vtanh.pop %v1115
      %v1212 = vtanh.pop %v1118
      %v1213 = vtanh.pop %v1123
      %v1214 = vtanh.pop %v1126
      %v1215 = vtanh.pop %v1131
      %v1216 = vtanh.pop %v1134
      %v1217 = vtanh.pop %v1139
      %v1218 = vtanh.pop %v1142
      %v1219 = vtanh.pop %v1147
      %v1220 = vtanh.pop %v1150
      %v1221 = vtanh.pop %v1155
      %v1222 = vtanh.pop %v1158
      %v1223 = vtanh.pop %v1163
      %v1224 = vtanh.pop %v1166
      %v1225 = vtanh.pop %v1171
      %v1226 = vtanh.pop %v1174
      %v1227 = vtanh.pop %v1179
      %v1228 = vtanh.pop %v1182
      %v1229 = vtanh.pop %v1187
      %v1230 = vtanh.pop %v1190
      %v1231 = vtanh.pop %v1195
      %v1232 = vtanh.pop %v1198
      %v1233 = vpack.c.bf16 %v1202, %v1201
      %v1234 = vpack.c.bf16 %v1204, %v1203
      %v1235 = vpack.c.bf16 %v1206, %v1205
      %v1236 = vpack.c.bf16 %v1208, %v1207
      %v1237 = vpack.c.bf16 %v1210, %v1209
      %v1238 = vpack.c.bf16 %v1212, %v1211
      %v1239 = vpack.c.bf16 %v1214, %v1213
      %v1240 = vpack.c.bf16 %v1216, %v1215
      %v1241 = vpack.c.bf16 %v1218, %v1217
      %v1242 = vpack.c.bf16 %v1220, %v1219
      %v1243 = vpack.c.bf16 %v1222, %v1221
      %v1244 = vpack.c.bf16 %v1224, %v1223
      %v1245 = vpack.c.bf16 %v1226, %v1225
      %v1246 = vpack.c.bf16 %v1228, %v1227
      %v1247 = vpack.c.bf16 %v1230, %v1229
      %v1248 = vpack.c.bf16 %v1232, %v1231
      %s1249 = scalar_lea.vmem %s2, 16
      %v1250 = vld [vmem:[%s1249] sm:$0xf]
      %v1251 = vld [vmem:[%s1249 + $0x4] sm:$0xf]
      %s1252 = scalar_lea.vmem %s3, 2
      %v1253 = vld [vmem:[%s1252] sm:$0x1]
      %v1255 = vlaneseq
      %v1256 = vshrl.u32 %v1255, 7
      %v1257 = vsub.s32 0, %v1256
      %v1258 = vrot.slane %v1253, %v1257
      %v1262 = vunpack.c.l.b16 %v1250
      %v1263 = vunpack.c.l.b16 %v1251
      %v1264 = vpack.c.b16 %v1263, %v1262
      %v1267 = vsel %vm619, %v1233, 0
      %v1270 = vsel %vm619, %v1234, 0
      %v1273 = vsel %vm619, %v1235, 0
      %v1276 = vsel %vm619, %v1236, 0
      %v1279 = vsel %vm619, %v1237, 0
      %v1282 = vsel %vm619, %v1238, 0
      %v1285 = vsel %vm619, %v1239, 0
      %v1288 = vsel %vm619, %v1240, 0
      %v1291 = vsel %vm619, %v1241, 0
      %v1294 = vsel %vm619, %v1242, 0
      %v1297 = vsel %vm619, %v1243, 0
      %v1300 = vsel %vm619, %v1244, 0
      %v1303 = vsel %vm619, %v1245, 0
      %v1306 = vsel %vm619, %v1246, 0
      %v1309 = vsel %vm619, %v1247, 0
      %v1312 = vsel %vm619, %v1248, 0
      %1314 = vmatprep.subr.bf16.mxu0 0
      %1315 = vmatpush1.bf16.msra.mxu0 %v1264
      %1316 = vmatprep.subr.bf16.mxu0 0
      %1317 = vmatpush1.bf16.msra.mxu0 0
      %1318 = vmatprep.subr.bf16.mxu0 0
      %1319 = vmatpush1.bf16.msra.mxu0 0
      %1320 = vmatprep.subr.bf16.mxu0 0
      %1321 = vmatpush1.bf16.msra.mxu0 0
      %1322 = vmatprep.subr.bf16.mxu0 0
      %1323 = vmatpush1.bf16.msra.mxu0 0
      %1324 = vmatprep.subr.bf16.mxu0 0
      %1325 = vmatpush1.bf16.msra.mxu0 0
      %1326 = vmatprep.subr.bf16.mxu0 0
      %1327 = vmatpush1.bf16.msra.mxu0 0
      %1328 = vmatprep.subr.bf16.mxu0 0
      %1329 = vmatpush1.bf16.msra.mxu0 0
      %1330 = vmatprep.subr.bf16.mxu0 0
      %1331 = vmatpush1.bf16.msra.mxu0 0
      %1332 = vmatprep.subr.bf16.mxu0 0
      %1333 = vmatpush1.bf16.msra.mxu0 0
      %1334 = vmatprep.subr.bf16.mxu0 0
      %1335 = vmatpush1.bf16.msra.mxu0 0
      %1336 = vmatprep.subr.bf16.mxu0 0
      %1337 = vmatpush1.bf16.msra.mxu0 0
      %1338 = vmatprep.subr.bf16.mxu0 0
      %1339 = vmatpush1.bf16.msra.mxu0 0
      %1340 = vmatprep.subr.bf16.mxu0 0
      %1341 = vmatpush1.bf16.msra.mxu0 0
      %1342 = vmatprep.subr.bf16.mxu0 0
      %1343 = vmatpush1.bf16.msra.mxu0 0
      %1344 = vmatprep.subr.bf16.mxu0 0
      %1345 = vmatpush1.bf16.msra.mxu0 0
      %1346 = vmatprep.mubr.bf16.mxu0 0
      %1347 = vmatmul.mubr.bf16.gmra.mrb[0].mxu0 %v1267
      %v1348 = vpop.f32.mrb[0].mxu0
      %v1349 = vadd.f32 %v1258, %v1348
      %v1350 = vpop.f32.mrb[0].mxu0
      %v1351 = vpop.f32.mrb[0].mxu0
      %v1352 = vadd.f32 %v1258, %v1351
      %v1353 = vpop.f32.mrb[0].mxu0
      %1354 = vmatprep.mubr.bf16.mxu0 0
      %1355 = vmatmul.mubr.bf16.gmra.mrb[0].mxu0 %v1270
      %v1356 = vpop.f32.mrb[0].mxu0
      %v1357 = vadd.f32 %v1258, %v1356
      %v1358 = vpop.f32.mrb[0].mxu0
      %v1359 = vpop.f32.mrb[0].mxu0
      %v1360 = vadd.f32 %v1258, %v1359
      %v1361 = vpop.f32.mrb[0].mxu0
      %1362 = vmatprep.mubr.bf16.mxu0 0
      %1363 = vmatmul.mubr.bf16.gmra.mrb[0].mxu0 %v1273
      %v1364 = vpop.f32.mrb[0].mxu0
      %v1365 = vadd.f32 %v1258, %v1364
      %v1366 = vpop.f32.mrb[0].mxu0
      %v1367 = vpop.f32.mrb[0].mxu0
      %v1368 = vadd.f32 %v1258, %v1367
      %v1369 = vpop.f32.mrb[0].mxu0
      %1370 = vmatprep.mubr.bf16.mxu0 0
      %1371 = vmatmul.mubr.bf16.gmra.mrb[0].mxu0 %v1276
      %v1372 = vpop.f32.mrb[0].mxu0
      %v1373 = vadd.f32 %v1258, %v1372
      %v1374 = vpop.f32.mrb[0].mxu0
      %v1375 = vpop.f32.mrb[0].mxu0
      %v1376 = vadd.f32 %v1258, %v1375
      %v1377 = vpop.f32.mrb[0].mxu0
      %1378 = vmatprep.mubr.bf16.mxu0 0
      %1379 = vmatmul.mubr.bf16.gmra.mrb[0].mxu0 %v1279
      %v1380 = vpop.f32.mrb[0].mxu0
      %v1381 = vadd.f32 %v1258, %v1380
      %v1382 = vpop.f32.mrb[0].mxu0
      %v1383 = vpop.f32.mrb[0].mxu0
      %v1384 = vadd.f32 %v1258, %v1383
      %v1385 = vpop.f32.mrb[0].mxu0
      %1386 = vmatprep.mubr.bf16.mxu0 0
      %1387 = vmatmul.mubr.bf16.gmra.mrb[0].mxu0 %v1282
      %v1388 = vpop.f32.mrb[0].mxu0
      %v1389 = vadd.f32 %v1258, %v1388
      %v1390 = vpop.f32.mrb[0].mxu0
      %v1391 = vpop.f32.mrb[0].mxu0
      %v1392 = vadd.f32 %v1258, %v1391
      %v1393 = vpop.f32.mrb[0].mxu0
      %1394 = vmatprep.mubr.bf16.mxu0 0
      %1395 = vmatmul.mubr.bf16.gmra.mrb[0].mxu0 %v1285
      %v1396 = vpop.f32.mrb[0].mxu0
      %v1397 = vadd.f32 %v1258, %v1396
      %v1398 = vpop.f32.mrb[0].mxu0
      %v1399 = vpop.f32.mrb[0].mxu0
      %v1400 = vadd.f32 %v1258, %v1399
      %v1401 = vpop.f32.mrb[0].mxu0
      %1402 = vmatprep.mubr.bf16.mxu0 0
      %1403 = vmatmul.mubr.bf16.gmra.mrb[0].mxu0 %v1288
      %v1404 = vpop.f32.mrb[0].mxu0
      %v1405 = vadd.f32 %v1258, %v1404
      %v1406 = vpop.f32.mrb[0].mxu0
      %v1407 = vpop.f32.mrb[0].mxu0
      %v1408 = vadd.f32 %v1258, %v1407
      %v1409 = vpop.f32.mrb[0].mxu0
      %1410 = vmatprep.mubr.bf16.mxu0 0
      %1411 = vmatmul.mubr.bf16.gmra.mrb[0].mxu0 %v1291
      %v1412 = vpop.f32.mrb[0].mxu0
      %v1413 = vadd.f32 %v1258, %v1412
      %v1414 = vpop.f32.mrb[0].mxu0
      %v1415 = vpop.f32.mrb[0].mxu0
      %v1416 = vadd.f32 %v1258, %v1415
      %v1417 = vpop.f32.mrb[0].mxu0
      %1418 = vmatprep.mubr.bf16.mxu0 0
      %1419 = vmatmul.mubr.bf16.gmra.mrb[0].mxu0 %v1294
      %v1420 = vpop.f32.mrb[0].mxu0
      %v1421 = vadd.f32 %v1258, %v1420
      %v1422 = vpop.f32.mrb[0].mxu0
      %v1423 = vpop.f32.mrb[0].mxu0
      %v1424 = vadd.f32 %v1258, %v1423
      %v1425 = vpop.f32.mrb[0].mxu0
      %1426 = vmatprep.mubr.bf16.mxu0 0
      %1427 = vmatmul.mubr.bf16.gmra.mrb[0].mxu0 %v1297
      %v1428 = vpop.f32.mrb[0].mxu0
      %v1429 = vadd.f32 %v1258, %v1428
      %v1430 = vpop.f32.mrb[0].mxu0
      %v1431 = vpop.f32.mrb[0].mxu0
      %v1432 = vadd.f32 %v1258, %v1431
      %v1433 = vpop.f32.mrb[0].mxu0
      %1434 = vmatprep.mubr.bf16.mxu0 0
      %1435 = vmatmul.mubr.bf16.gmra.mrb[0].mxu0 %v1300
      %v1436 = vpop.f32.mrb[0].mxu0
      %v1437 = vadd.f32 %v1258, %v1436
      %v1438 = vpop.f32.mrb[0].mxu0
      %v1439 = vpop.f32.mrb[0].mxu0
      %v1440 = vadd.f32 %v1258, %v1439
      %v1441 = vpop.f32.mrb[0].mxu0
      %1442 = vmatprep.mubr.bf16.mxu0 0
      %1443 = vmatmul.mubr.bf16.gmra.mrb[0].mxu0 %v1303
      %v1444 = vpop.f32.mrb[0].mxu0
      %v1445 = vadd.f32 %v1258, %v1444
      %v1446 = vpop.f32.mrb[0].mxu0
      %v1447 = vpop.f32.mrb[0].mxu0
      %v1448 = vadd.f32 %v1258, %v1447
      %v1449 = vpop.f32.mrb[0].mxu0
      %1450 = vmatprep.mubr.bf16.mxu0 0
      %1451 = vmatmul.mubr.bf16.gmra.mrb[0].mxu0 %v1306
      %v1452 = vpop.f32.mrb[0].mxu0
      %v1453 = vadd.f32 %v1258, %v1452
      %v1454 = vpop.f32.mrb[0].mxu0
      %v1455 = vpop.f32.mrb[0].mxu0
      %v1456 = vadd.f32 %v1258, %v1455
      %v1457 = vpop.f32.mrb[0].mxu0
      %1458 = vmatprep.mubr.bf16.mxu0 0
      %1459 = vmatmul.mubr.bf16.gmra.mrb[0].mxu0 %v1309
      %v1460 = vpop.f32.mrb[0].mxu0
      %v1461 = vadd.f32 %v1258, %v1460
      %v1462 = vpop.f32.mrb[0].mxu0
      %v1463 = vpop.f32.mrb[0].mxu0
      %v1464 = vadd.f32 %v1258, %v1463
      %v1465 = vpop.f32.mrb[0].mxu0
      %1466 = vmatprep.mubr.bf16.mxu0 0
      %1467 = vmatmul.mubr.bf16.gmra.mrb[0].mxu0 %v1312
      %v1468 = vpop.f32.mrb[0].mxu0
      %v1469 = vadd.f32 %v1258, %v1468
      %v1470 = vpop.f32.mrb[0].mxu0
      %v1471 = vpop.f32.mrb[0].mxu0
      %v1472 = vadd.f32 %v1258, %v1471
      %v1473 = vpop.f32.mrb[0].mxu0
      %1474 = vdwg.mxu0
      %v1475 = vtanh.pop %v1349
      %v1476 = vtanh.pop %v1352
      %v1477 = vtanh.pop %v1357
      %v1478 = vtanh.pop %v1360
      %v1479 = vtanh.pop %v1365
      %v1480 = vtanh.pop %v1368
      %v1481 = vtanh.pop %v1373
      %v1482 = vtanh.pop %v1376
      %v1483 = vtanh.pop %v1381
      %v1484 = vtanh.pop %v1384
      %v1485 = vtanh.pop %v1389
      %v1486 = vtanh.pop %v1392
      %v1487 = vtanh.pop %v1397
      %v1488 = vtanh.pop %v1400
      %v1489 = vtanh.pop %v1405
      %v1490 = vtanh.pop %v1408
      %v1491 = vtanh.pop %v1413
      %v1492 = vtanh.pop %v1416
      %v1493 = vtanh.pop %v1421
      %v1494 = vtanh.pop %v1424
      %v1495 = vtanh.pop %v1429
      %v1496 = vtanh.pop %v1432
      %v1497 = vtanh.pop %v1437
      %v1498 = vtanh.pop %v1440
      %v1499 = vtanh.pop %v1445
      %v1500 = vtanh.pop %v1448
      %v1501 = vtanh.pop %v1453
      %v1502 = vtanh.pop %v1456
      %v1503 = vtanh.pop %v1461
      %v1504 = vtanh.pop %v1464
      %v1505 = vtanh.pop %v1469
      %v1506 = vtanh.pop %v1472
      %v1507 = vtanh.pop %v1475
      %v1508 = vtanh.pop %v1476
      %v1509 = vtanh.pop %v1477
      %v1510 = vtanh.pop %v1478
      %v1511 = vtanh.pop %v1479
      %v1512 = vtanh.pop %v1480
      %v1513 = vtanh.pop %v1481
      %v1514 = vtanh.pop %v1482
      %v1515 = vtanh.pop %v1483
      %v1516 = vtanh.pop %v1484
      %v1517 = vtanh.pop %v1485
      %v1518 = vtanh.pop %v1486
      %v1519 = vtanh.pop %v1487
      %v1520 = vtanh.pop %v1488
      %v1521 = vtanh.pop %v1489
      %v1522 = vtanh.pop %v1490
      %v1523 = vtanh.pop %v1491
      %v1524 = vtanh.pop %v1492
      %v1525 = vtanh.pop %v1493
      %v1526 = vtanh.pop %v1494
      %v1527 = vtanh.pop %v1495
      %v1528 = vtanh.pop %v1496
      %v1529 = vtanh.pop %v1497
      %v1530 = vtanh.pop %v1498
      %v1531 = vtanh.pop %v1499
      %v1532 = vtanh.pop %v1500
      %v1533 = vtanh.pop %v1501
      %v1534 = vtanh.pop %v1502
      %v1535 = vtanh.pop %v1503
      %v1536 = vtanh.pop %v1504
      %v1537 = vtanh.pop %v1505
      %v1538 = vtanh.pop %v1506
      %v1539 = vpack.c.bf16 %v1508, %v1507
      %v1540 = vpack.c.bf16 %v1510, %v1509
      %v1541 = vpack.c.bf16 %v1512, %v1511
      %v1542 = vpack.c.bf16 %v1514, %v1513
      %v1543 = vpack.c.bf16 %v1516, %v1515
      %v1544 = vpack.c.bf16 %v1518, %v1517
      %v1545 = vpack.c.bf16 %v1520, %v1519
      %v1546 = vpack.c.bf16 %v1522, %v1521
      %v1547 = vpack.c.bf16 %v1524, %v1523
      %v1548 = vpack.c.bf16 %v1526, %v1525
      %v1549 = vpack.c.bf16 %v1528, %v1527
      %v1550 = vpack.c.bf16 %v1530, %v1529
      %v1551 = vpack.c.bf16 %v1532, %v1531
      %v1552 = vpack.c.bf16 %v1534, %v1533
      %v1553 = vpack.c.bf16 %v1536, %v1535
      %v1554 = vpack.c.bf16 %v1538, %v1537
      %v1571 = vunpack.c.l.b16 %v1539
      %v1572 = vunpack.c.h.b16 %v1539
      %v1573 = vunpack.c.l.b16 %v1540
      %v1574 = vunpack.c.h.b16 %v1540
      %v1575 = vunpack.c.l.b16 %v1541
      %v1576 = vunpack.c.h.b16 %v1541
      %v1577 = vunpack.c.l.b16 %v1542
      %v1578 = vunpack.c.h.b16 %v1542
      %v1579 = vunpack.c.l.b16 %v1543
      %v1580 = vunpack.c.h.b16 %v1543
      %v1581 = vunpack.c.l.b16 %v1544
      %v1582 = vunpack.c.h.b16 %v1544
      %v1583 = vunpack.c.l.b16 %v1545
      %v1584 = vunpack.c.h.b16 %v1545
      %v1585 = vunpack.c.l.b16 %v1546
      %v1586 = vunpack.c.h.b16 %v1546
      %v1587 = vunpack.c.l.b16 %v1547
      %v1588 = vunpack.c.h.b16 %v1547
      %v1589 = vunpack.c.l.b16 %v1548
      %v1590 = vunpack.c.h.b16 %v1548
      %v1591 = vunpack.c.l.b16 %v1549
      %v1592 = vunpack.c.h.b16 %v1549
      %v1593 = vunpack.c.l.b16 %v1550
      %v1594 = vunpack.c.h.b16 %v1550
      %v1595 = vunpack.c.l.b16 %v1551
      %v1596 = vunpack.c.h.b16 %v1551
      %v1597 = vunpack.c.l.b16 %v1552
      %v1598 = vunpack.c.h.b16 %v1552
      %v1599 = vunpack.c.l.b16 %v1553
      %v1600 = vunpack.c.h.b16 %v1553
      %v1601 = vunpack.c.l.b16 %v1554
      %v1602 = vunpack.c.h.b16 %v1554
      %v1603 = vpack.c.b16 %v1571, %v1571
      %v1604 = vpack.c.b16 %v1572, %v1572
      %v1605 = vpack.c.b16 %v1573, %v1573
      %v1606 = vpack.c.b16 %v1574, %v1574
      %v1607 = vpack.c.b16 %v1575, %v1575
      %v1608 = vpack.c.b16 %v1576, %v1576
      %v1609 = vpack.c.b16 %v1577, %v1577
      %v1610 = vpack.c.b16 %v1578, %v1578
      %v1611 = vpack.c.b16 %v1579, %v1579
      %v1612 = vpack.c.b16 %v1580, %v1580
      %v1613 = vpack.c.b16 %v1581, %v1581
      %v1614 = vpack.c.b16 %v1582, %v1582
      %v1615 = vpack.c.b16 %v1583, %v1583
      %v1616 = vpack.c.b16 %v1584, %v1584
      %v1617 = vpack.c.b16 %v1585, %v1585
      %v1618 = vpack.c.b16 %v1586, %v1586
      %v1619 = vpack.c.b16 %v1587, %v1587
      %v1620 = vpack.c.b16 %v1588, %v1588
      %v1621 = vpack.c.b16 %v1589, %v1589
      %v1622 = vpack.c.b16 %v1590, %v1590
      %v1623 = vpack.c.b16 %v1591, %v1591
      %v1624 = vpack.c.b16 %v1592, %v1592
      %v1625 = vpack.c.b16 %v1593, %v1593
      %v1626 = vpack.c.b16 %v1594, %v1594
      %v1627 = vpack.c.b16 %v1595, %v1595
      %v1628 = vpack.c.b16 %v1596, %v1596
      %v1629 = vpack.c.b16 %v1597, %v1597
      %v1630 = vpack.c.b16 %v1598, %v1598
      %v1631 = vpack.c.b16 %v1599, %v1599
      %v1632 = vpack.c.b16 %v1600, %v1600
      %v1633 = vpack.c.b16 %v1601, %v1601
      %v1634 = vpack.c.b16 %v1602, %v1602
      %vm1667 = vcmask 125952
      %1668 = vst.msk [vmem:[%s4] sm:$0xf] %vm1667, %v1603
      %1669 = vst.msk [vmem:[%s4 + $0x4] sm:$0xf] %vm1667, %v1604
      %1670 = vst.msk [vmem:[%s4 + $0x8] sm:$0xf] %vm1667, %v1605
      %1671 = vst.msk [vmem:[%s4 + $0xc] sm:$0xf] %vm1667, %v1606
      %1672 = vst.msk [vmem:[%s4 + $0x10] sm:$0xf] %vm1667, %v1607
      %1673 = vst.msk [vmem:[%s4 + $0x14] sm:$0xf] %vm1667, %v1608
      %1674 = vst.msk [vmem:[%s4 + $0x18] sm:$0xf] %vm1667, %v1609
      %1675 = vst.msk [vmem:[%s4 + $0x1c] sm:$0xf] %vm1667, %v1610
      %1676 = vst.msk [vmem:[%s4 + $0x20] sm:$0xf] %vm1667, %v1611
      %1677 = vst.msk [vmem:[%s4 + $0x24] sm:$0xf] %vm1667, %v1612
      %1678 = vst.msk [vmem:[%s4 + $0x28] sm:$0xf] %vm1667, %v1613
      %1679 = vst.msk [vmem:[%s4 + $0x2c] sm:$0xf] %vm1667, %v1614
      %1680 = vst.msk [vmem:[%s4 + $0x30] sm:$0xf] %vm1667, %v1615
      %1681 = vst.msk [vmem:[%s4 + $0x34] sm:$0xf] %vm1667, %v1616
      %1682 = vst.msk [vmem:[%s4 + $0x38] sm:$0xf] %vm1667, %v1617
      %1683 = vst.msk [vmem:[%s4 + $0x3c] sm:$0xf] %vm1667, %v1618
      %1684 = vst.msk [vmem:[%s4 + $0x40] sm:$0xf] %vm1667, %v1619
      %1685 = vst.msk [vmem:[%s4 + $0x44] sm:$0xf] %vm1667, %v1620
      %1686 = vst.msk [vmem:[%s4 + $0x48] sm:$0xf] %vm1667, %v1621
      %1687 = vst.msk [vmem:[%s4 + $0x4c] sm:$0xf] %vm1667, %v1622
      %1688 = vst.msk [vmem:[%s4 + $0x50] sm:$0xf] %vm1667, %v1623
      %1689 = vst.msk [vmem:[%s4 + $0x54] sm:$0xf] %vm1667, %v1624
      %1690 = vst.msk [vmem:[%s4 + $0x58] sm:$0xf] %vm1667, %v1625
      %1691 = vst.msk [vmem:[%s4 + $0x5c] sm:$0xf] %vm1667, %v1626
      %1692 = vst.msk [vmem:[%s4 + $0x60] sm:$0xf] %vm1667, %v1627
      %1693 = vst.msk [vmem:[%s4 + $0x64] sm:$0xf] %vm1667, %v1628
      %1694 = vst.msk [vmem:[%s4 + $0x68] sm:$0xf] %vm1667, %v1629
      %1695 = vst.msk [vmem:[%s4 + $0x6c] sm:$0xf] %vm1667, %v1630
      %1696 = vst.msk [vmem:[%s4 + $0x70] sm:$0xf] %vm1667, %v1631
      %1697 = vst.msk [vmem:[%s4 + $0x74] sm:$0xf] %vm1667, %v1632
      %1698 = vst.msk [vmem:[%s4 + $0x78] sm:$0xf] %vm1667, %v1633
      %1699 = vst.msk [vmem:[%s4 + $0x7c] sm:$0xf] %vm1667, %v1634
    $region29: #{tpu_custom_call.1} parent=1 // pred_fallthru
      _
    // Predicated region
    $region30: #{tpu_custom_call.1} parent=1 // pred_check
      _
    $region31: #{tpu_custom_call.1} parent=1 // pred_check_branch
      %1701 = sbr.rel (0) target = $region33
    $region32: #{tpu_custom_call.1} parent=1 // pred_region
      _
    $region33: #{tpu_custom_call.1} parent=1 // pred_fallthru
      _
    // Predicated region
    $region34: #{tpu_custom_call.1} parent=1 // pred_check
      _
    $region35: #{tpu_custom_call.1} parent=1 // pred_check_branch
      %1703 = sbr.rel (0) target = $region37
    $region36: #{tpu_custom_call.1} parent=1 // pred_region
      _
    $region37: #{tpu_custom_call.1} parent=1 // pred_fallthru
      _
    %1704 = vsyncpa [#allocation4], 1

</llo_original>
